<compile_context>
chip_gen: v6e
topology: v6e:2x2x1
jax: 0.10.0
libtpu: 0.0.40
codegen_flags: <defaults>
</compile_context>

<pallas_src>
import jax
import jax.numpy as jnp
from jax.experimental import pallas as pl
from jax.experimental.pallas import tpu as pltpu

INPUT_SIZE = 4
HIDDEN = 100          # logical hidden size (PyTorch module)
HIDDEN_PAD = 128      # padded hidden size (full lane tile)
OUTPUT_SIZE = 1
SEQ_LEN = 8


def lstm_kernel(x_ref, wih_ref, whh_ref, b_ref, wlin_ref, blin_ref,
                out_ref, xproj_ref):
    T = x_ref.shape[0]
    Hp = whh_ref.shape[0]

    # Hoisted input projection + fused bias for all timesteps: ONE small matmul.
    # (T, I) @ (I, 4*Hp) + (1, 4*Hp) -> (T, 4*Hp) kept in VMEM scratch.
    xproj_ref[...] = (jnp.dot(x_ref[...], wih_ref[...],
                              preferred_element_type=jnp.float32)
                      + b_ref[...])

    def step(t, carry):
        h, c = carry                                   # (1, Hp) vregs, loop-carried
        # One fused recurrent matmul per step: (1, Hp) @ (Hp, 4*Hp).
        gates = xproj_ref[pl.ds(t, 1), :] + jnp.dot(
            h, whh_ref[...], preferred_element_type=jnp.float32)
        # Gate slices at 128-lane tile boundaries (free vreg views). PyTorch order i,f,g,o.
        i_g = jax.nn.sigmoid(gates[:, 0 * Hp:1 * Hp])
        f_g = jax.nn.sigmoid(gates[:, 1 * Hp:2 * Hp])
        g_g = jnp.tanh(gates[:, 2 * Hp:3 * Hp])
        o_g = jax.nn.sigmoid(gates[:, 3 * Hp:4 * Hp])
        c_new = f_g * c + i_g * g_g
        h_new = o_g * jnp.tanh(c_new)
        return (h_new, c_new)

    h0 = jnp.zeros((1, Hp), jnp.float32)               # module's hidden_cell is zeros
    c0 = jnp.zeros((1, Hp), jnp.float32)
    h, _ = jax.lax.fori_loop(0, T, step, (h0, c0), unroll=True)

    # predictions[-1] == Linear(h_T): VPU multiply + lane reduction (skip N=1 MXU matmul).
    out_ref[...] = (jnp.sum(h * wlin_ref[...], axis=-1, keepdims=True)
                    + blin_ref[...])


def init_params(key, input_size=INPUT_SIZE, hidden=HIDDEN, output_size=OUTPUT_SIZE):
    """Deterministic init mimicking PyTorch's uniform(-1/sqrt(H), 1/sqrt(H))."""
    k = 1.0 / jnp.sqrt(jnp.float32(hidden))
    keys = jax.random.split(key, 6)
    w_ih = jax.random.uniform(keys[0], (4 * hidden, input_size), jnp.float32, -k, k)
    w_hh = jax.random.uniform(keys[1], (4 * hidden, hidden), jnp.float32, -k, k)
    b_ih = jax.random.uniform(keys[2], (4 * hidden,), jnp.float32, -k, k)
    b_hh = jax.random.uniform(keys[3], (4 * hidden,), jnp.float32, -k, k)
    w_lin = jax.random.uniform(keys[4], (output_size, hidden), jnp.float32, -k, k)
    b_lin = jax.random.uniform(keys[5], (output_size,), jnp.float32, -k, k)
    return w_ih, w_hh, b_ih, b_hh, w_lin, b_lin


def _fuse_and_pad(params):
    """PyTorch (i,f,g,o) weights -> fused, lane-padded operands for the kernel."""
    w_ih, w_hh, b_ih, b_hh, w_lin, b_lin = params
    H, Hp = HIDDEN, HIDDEN_PAD

    wih_f = jnp.zeros((INPUT_SIZE, 4 * Hp), jnp.float32)   # (I, 4*Hp)
    whh_f = jnp.zeros((Hp, 4 * Hp), jnp.float32)           # (Hp, 4*Hp)
    b_f = jnp.zeros((1, 4 * Hp), jnp.float32)               # (1, 4*Hp)
    b = b_ih + b_hh
    for g in range(4):
        wih_f = wih_f.at[:, g * Hp:g * Hp + H].set(w_ih[g * H:(g + 1) * H, :].T)
        whh_f = whh_f.at[:H, g * Hp:g * Hp + H].set(w_hh[g * H:(g + 1) * H, :].T)
        b_f = b_f.at[0, g * Hp:g * Hp + H].set(b[g * H:(g + 1) * H])

    wlin_row = jnp.zeros((1, Hp), jnp.float32).at[0, :H].set(w_lin[0])  # (1, Hp)
    blin2 = b_lin.reshape(1, 1)
    return wih_f, whh_f, b_f, wlin_row, blin2


def lstm_forward(x, params):
    """x: (T, I) float32 -> prediction of last timestep, shape (OUTPUT_SIZE,)."""
    wih_f, whh_f, b_f, wlin_row, blin2 = _fuse_and_pad(params)
    T = x.shape[0]

    vmem = pl.BlockSpec(memory_space=pltpu.MemorySpace.VMEM)
    out = pl.pallas_call(
        lstm_kernel,
        out_shape=jax.ShapeDtypeStruct((1, OUTPUT_SIZE), jnp.float32),
        in_specs=[vmem] * 6,
        out_specs=vmem,
        scratch_shapes=[pltpu.VMEM((T, 4 * HIDDEN_PAD), jnp.float32)],  # xproj buffer
    )(x, wih_f, whh_f, b_f, wlin_row, blin2)
    return out.reshape(OUTPUT_SIZE)


def lstm_forward_ref(x, params):
    """Pure-JAX reference of the PyTorch forward (for validation)."""
    w_ih, w_hh, b_ih, b_hh, w_lin, b_lin = params
    H = HIDDEN
    h = jnp.zeros((1, H), jnp.float32)
    c = jnp.zeros((1, H), jnp.float32)

    def step(carry, x_t):
        h, c = carry
        gates = x_t[None, :] @ w_ih.T + b_ih + h @ w_hh.T + b_hh
        i = jax.nn.sigmoid(gates[:, 0:H])
        f = jax.nn.sigmoid(gates[:, H:2 * H])
        g = jnp.tanh(gates[:, 2 * H:3 * H])
        o = jax.nn.sigmoid(gates[:, 3 * H:4 * H])
        c = f * c + i * g
        h = o * jnp.tanh(c)
        return (h, c), h

    (h, c), _ = jax.lax.scan(step, (h, c), x)
    return (h @ w_lin.T + b_lin).reshape(OUTPUT_SIZE)


if __name__ == "__main__":
    # TODO(synk): the PyTorch module carries self.hidden_cell across forward() calls; this
    # kernel matches the module's initial zero state (fresh h0=c0=0 every call).
    key = jax.random.PRNGKey(0)
    k_params, k_x = jax.random.split(key)
    params = init_params(k_params)
    x = jax.random.normal(k_x, (SEQ_LEN, INPUT_SIZE), jnp.float32)

    pred = jax.block_until_ready(lstm_forward(x, params))
    ref = jax.block_until_ready(lstm_forward_ref(x, params))

    assert pred.shape == (OUTPUT_SIZE,)
    assert jnp.allclose(pred, ref, atol=1e-5, rtol=1e-5), (pred, ref)
    print("KERNEL_OK")
</pallas_src>

<mosaic_0001>
module attributes {stable_mosaic.version = 11 : i64} {
  func.func @lstm_kernel(%arg0: memref<8x4xf32, #tpu.memory_space<vmem>>, %arg1: memref<4x512xf32, #tpu.memory_space<vmem>>, %arg2: memref<128x512xf32, #tpu.memory_space<vmem>>, %arg3: memref<1x512xf32, #tpu.memory_space<vmem>>, %arg4: memref<1x128xf32, #tpu.memory_space<vmem>>, %arg5: memref<1x1xf32, #tpu.memory_space<vmem>>, %arg6: memref<1x1xf32, #tpu.memory_space<vmem>>, %arg7: memref<8x512xf32, #tpu.memory_space<vmem>>) attributes {dimension_semantics = [], scalar_prefetch = 0 : i64, scratch_operands = 1 : i64, tpu.core_type = #tpu.core_type<tc>} {
    %c0 = arith.constant 0 : index
    %c0_0 = arith.constant 0 : index
    %0 = vector.load %arg0[%c0, %c0_0] : memref<8x4xf32, #tpu.memory_space<vmem>>, vector<8x4xf32>
    %c0_1 = arith.constant 0 : index
    %c0_2 = arith.constant 0 : index
    %1 = vector.load %arg1[%c0_1, %c0_2] : memref<4x512xf32, #tpu.memory_space<vmem>>, vector<4x512xf32>
    %cst = arith.constant dense<0.000000e+00> : vector<8x512xf32>
    %2 = tpu.matmul %0, %1, %cst {dimension_numbers = #tpu.dot_dimension_numbers<[1], [0], [0], [1], [0, 0, 1, 1], [], []>} : vector<8x4xf32>, vector<4x512xf32>, vector<8x512xf32> -> vector<8x512xf32>
    %c0_3 = arith.constant 0 : index
    %c0_4 = arith.constant 0 : index
    %3 = vector.load %arg3[%c0_3, %c0_4] : memref<1x512xf32, #tpu.memory_space<vmem>>, vector<1x512xf32>
    %4 = vector.broadcast %3 : vector<1x512xf32> to vector<8x512xf32>
    %5 = arith.addf %2, %4 : vector<8x512xf32>
    %c0_5 = arith.constant 0 : index
    %c0_6 = arith.constant 0 : index
    %6 = vector.load %arg7[%c0_5, %c0_6] : memref<8x512xf32, #tpu.memory_space<vmem>>, vector<8x512xf32>
    tpu.vector_store %arg7[%c0_5, %c0_6], %5 {strides = array<i32>} : memref<8x512xf32, #tpu.memory_space<vmem>>, vector<8x512xf32>,
    %cst_7 = arith.constant 0.000000e+00 : f32
    %7 = vector.broadcast %cst_7 : f32 to vector<1x128xf32>
    %cst_8 = arith.constant 0.000000e+00 : f32
    %8 = vector.broadcast %cst_8 : f32 to vector<1x128xf32>
    %c0_i32 = arith.constant 0 : i32
    %9 = arith.index_cast %c0_i32 : i32 to index
    %c0_9 = arith.constant 0 : index
    %10 = vector.load %arg7[%9, %c0_9] : memref<8x512xf32, #tpu.memory_space<vmem>>, vector<1x512xf32>
    %c0_10 = arith.constant 0 : index
    %c0_11 = arith.constant 0 : index
    %11 = vector.load %arg2[%c0_10, %c0_11] : memref<128x512xf32, #tpu.memory_space<vmem>>, vector<128x512xf32>
    %cst_12 = arith.constant dense<0.000000e+00> : vector<1x512xf32>
    %12 = tpu.matmul %7, %11, %cst_12 {dimension_numbers = #tpu.dot_dimension_numbers<[1], [0], [0], [1], [0, 0, 1, 1], [], []>} : vector<1x128xf32>, vector<128x512xf32>, vector<1x512xf32> -> vector<1x512xf32>
    %13 = arith.addf %10, %12 : vector<1x512xf32>
    %14 = vector.extract_strided_slice %13 {offsets = [0, 0], sizes = [1, 128], strides = [1, 1]} : vector<1x512xf32> to vector<1x128xf32>
    %15 = arith.negf %14 : vector<1x128xf32>
    %16 = math.exp %15 : vector<1x128xf32>
    %cst_13 = arith.constant 1.000000e+00 : f32
    %17 = vector.broadcast %cst_13 : f32 to vector<1x128xf32>
    %18 = arith.addf %17, %16 : vector<1x128xf32>
    %19 = arith.divf %17, %18 : vector<1x128xf32>
    %20 = vector.extract_strided_slice %13 {offsets = [0, 128], sizes = [1, 128], strides = [1, 1]} : vector<1x512xf32> to vector<1x128xf32>
    %21 = arith.negf %20 : vector<1x128xf32>
    %22 = math.exp %21 : vector<1x128xf32>
    %cst_14 = arith.constant 1.000000e+00 : f32
    %23 = vector.broadcast %cst_14 : f32 to vector<1x128xf32>
    %24 = arith.addf %23, %22 : vector<1x128xf32>
    %25 = arith.divf %23, %24 : vector<1x128xf32>
    %26 = vector.extract_strided_slice %13 {offsets = [0, 256], sizes = [1, 128], strides = [1, 1]} : vector<1x512xf32> to vector<1x128xf32>
    %27 = math.tanh %26 : vector<1x128xf32>
    %28 = vector.extract_strided_slice %13 {offsets = [0, 384], sizes = [1, 128], strides = [1, 1]} : vector<1x512xf32> to vector<1x128xf32>
    %29 = arith.negf %28 : vector<1x128xf32>
    %30 = math.exp %29 : vector<1x128xf32>
    %cst_15 = arith.constant 1.000000e+00 : f32
    %31 = vector.broadcast %cst_15 : f32 to vector<1x128xf32>
    %32 = arith.addf %31, %30 : vector<1x128xf32>
    %33 = arith.divf %31, %32 : vector<1x128xf32>
    %34 = arith.mulf %25, %8 : vector<1x128xf32>
    %35 = arith.mulf %19, %27 : vector<1x128xf32>
    %36 = arith.addf %34, %35 : vector<1x128xf32>
    %37 = math.tanh %36 : vector<1x128xf32>
    %38 = arith.mulf %33, %37 : vector<1x128xf32>
    %c1_i32 = arith.constant 1 : i32
    %39 = arith.index_cast %c1_i32 : i32 to index
    %c0_16 = arith.constant 0 : index
    %40 = vector.load %arg7[%39, %c0_16] : memref<8x512xf32, #tpu.memory_space<vmem>>, vector<1x512xf32>
    %c0_17 = arith.constant 0 : index
    %c0_18 = arith.constant 0 : index
    %41 = vector.load %arg2[%c0_17, %c0_18] : memref<128x512xf32, #tpu.memory_space<vmem>>, vector<128x512xf32>
    %cst_19 = arith.constant dense<0.000000e+00> : vector<1x512xf32>
    %42 = tpu.matmul %38, %41, %cst_19 {dimension_numbers = #tpu.dot_dimension_numbers<[1], [0], [0], [1], [0, 0, 1, 1], [], []>} : vector<1x128xf32>, vector<128x512xf32>, vector<1x512xf32> -> vector<1x512xf32>
    %43 = arith.addf %40, %42 : vector<1x512xf32>
    %44 = vector.extract_strided_slice %43 {offsets = [0, 0], sizes = [1, 128], strides = [1, 1]} : vector<1x512xf32> to vector<1x128xf32>
    %45 = arith.negf %44 : vector<1x128xf32>
    %46 = math.exp %45 : vector<1x128xf32>
    %cst_20 = arith.constant 1.000000e+00 : f32
    %47 = vector.broadcast %cst_20 : f32 to vector<1x128xf32>
    %48 = arith.addf %47, %46 : vector<1x128xf32>
    %49 = arith.divf %47, %48 : vector<1x128xf32>
    %50 = vector.extract_strided_slice %43 {offsets = [0, 128], sizes = [1, 128], strides = [1, 1]} : vector<1x512xf32> to vector<1x128xf32>
    %51 = arith.negf %50 : vector<1x128xf32>
    %52 = math.exp %51 : vector<1x128xf32>
    %cst_21 = arith.constant 1.000000e+00 : f32
    %53 = vector.broadcast %cst_21 : f32 to vector<1x128xf32>
    %54 = arith.addf %53, %52 : vector<1x128xf32>
    %55 = arith.divf %53, %54 : vector<1x128xf32>
    %56 = vector.extract_strided_slice %43 {offsets = [0, 256], sizes = [1, 128], strides = [1, 1]} : vector<1x512xf32> to vector<1x128xf32>
    %57 = math.tanh %56 : vector<1x128xf32>
    %58 = vector.extract_strided_slice %43 {offsets = [0, 384], sizes = [1, 128], strides = [1, 1]} : vector<1x512xf32> to vector<1x128xf32>
    %59 = arith.negf %58 : vector<1x128xf32>
    %60 = math.exp %59 : vector<1x128xf32>
    %cst_22 = arith.constant 1.000000e+00 : f32
    %61 = vector.broadcast %cst_22 : f32 to vector<1x128xf32>
    %62 = arith.addf %61, %60 : vector<1x128xf32>
    %63 = arith.divf %61, %62 : vector<1x128xf32>
    %64 = arith.mulf %55, %36 : vector<1x128xf32>
    %65 = arith.mulf %49, %57 : vector<1x128xf32>
    %66 = arith.addf %64, %65 : vector<1x128xf32>
    %67 = math.tanh %66 : vector<1x128xf32>
    %68 = arith.mulf %63, %67 : vector<1x128xf32>
    %c2_i32 = arith.constant 2 : i32
    %69 = arith.index_cast %c2_i32 : i32 to index
    %c0_23 = arith.constant 0 : index
    %70 = vector.load %arg7[%69, %c0_23] : memref<8x512xf32, #tpu.memory_space<vmem>>, vector<1x512xf32>
    %c0_24 = arith.constant 0 : index
    %c0_25 = arith.constant 0 : index
    %71 = vector.load %arg2[%c0_24, %c0_25] : memref<128x512xf32, #tpu.memory_space<vmem>>, vector<128x512xf32>
    %cst_26 = arith.constant dense<0.000000e+00> : vector<1x512xf32>
    %72 = tpu.matmul %68, %71, %cst_26 {dimension_numbers = #tpu.dot_dimension_numbers<[1], [0], [0], [1], [0, 0, 1, 1], [], []>} : vector<1x128xf32>, vector<128x512xf32>, vector<1x512xf32> -> vector<1x512xf32>
    %73 = arith.addf %70, %72 : vector<1x512xf32>
    %74 = vector.extract_strided_slice %73 {offsets = [0, 0], sizes = [1, 128], strides = [1, 1]} : vector<1x512xf32> to vector<1x128xf32>
    %75 = arith.negf %74 : vector<1x128xf32>
    %76 = math.exp %75 : vector<1x128xf32>
    %cst_27 = arith.constant 1.000000e+00 : f32
    %77 = vector.broadcast %cst_27 : f32 to vector<1x128xf32>
    %78 = arith.addf %77, %76 : vector<1x128xf32>
    %79 = arith.divf %77, %78 : vector<1x128xf32>
    %80 = vector.extract_strided_slice %73 {offsets = [0, 128], sizes = [1, 128], strides = [1, 1]} : vector<1x512xf32> to vector<1x128xf32>
    %81 = arith.negf %80 : vector<1x128xf32>
    %82 = math.exp %81 : vector<1x128xf32>
    %cst_28 = arith.constant 1.000000e+00 : f32
    %83 = vector.broadcast %cst_28 : f32 to vector<1x128xf32>
    %84 = arith.addf %83, %82 : vector<1x128xf32>
    %85 = arith.divf %83, %84 : vector<1x128xf32>
    %86 = vector.extract_strided_slice %73 {offsets = [0, 256], sizes = [1, 128], strides = [1, 1]} : vector<1x512xf32> to vector<1x128xf32>
    %87 = math.tanh %86 : vector<1x128xf32>
    %88 = vector.extract_strided_slice %73 {offsets = [0, 384], sizes = [1, 128], strides = [1, 1]} : vector<1x512xf32> to vector<1x128xf32>
    %89 = arith.negf %88 : vector<1x128xf32>
    %90 = math.exp %89 : vector<1x128xf32>
    %cst_29 = arith.constant 1.000000e+00 : f32
    %91 = vector.broadcast %cst_29 : f32 to vector<1x128xf32>
    %92 = arith.addf %91, %90 : vector<1x128xf32>
    %93 = arith.divf %91, %92 : vector<1x128xf32>
    %94 = arith.mulf %85, %66 : vector<1x128xf32>
    %95 = arith.mulf %79, %87 : vector<1x128xf32>
    %96 = arith.addf %94, %95 : vector<1x128xf32>
    %97 = math.tanh %96 : vector<1x128xf32>
    %98 = arith.mulf %93, %97 : vector<1x128xf32>
    %c3_i32 = arith.constant 3 : i32
    %99 = arith.index_cast %c3_i32 : i32 to index
    %c0_30 = arith.constant 0 : index
    %100 = vector.load %arg7[%99, %c0_30] : memref<8x512xf32, #tpu.memory_space<vmem>>, vector<1x512xf32>
    %c0_31 = arith.constant 0 : index
    %c0_32 = arith.constant 0 : index
    %101 = vector.load %arg2[%c0_31, %c0_32] : memref<128x512xf32, #tpu.memory_space<vmem>>, vector<128x512xf32>
    %cst_33 = arith.constant dense<0.000000e+00> : vector<1x512xf32>
    %102 = tpu.matmul %98, %101, %cst_33 {dimension_numbers = #tpu.dot_dimension_numbers<[1], [0], [0], [1], [0, 0, 1, 1], [], []>} : vector<1x128xf32>, vector<128x512xf32>, vector<1x512xf32> -> vector<1x512xf32>
    %103 = arith.addf %100, %102 : vector<1x512xf32>
    %104 = vector.extract_strided_slice %103 {offsets = [0, 0], sizes = [1, 128], strides = [1, 1]} : vector<1x512xf32> to vector<1x128xf32>
    %105 = arith.negf %104 : vector<1x128xf32>
    %106 = math.exp %105 : vector<1x128xf32>
    %cst_34 = arith.constant 1.000000e+00 : f32
    %107 = vector.broadcast %cst_34 : f32 to vector<1x128xf32>
    %108 = arith.addf %107, %106 : vector<1x128xf32>
    %109 = arith.divf %107, %108 : vector<1x128xf32>
    %110 = vector.extract_strided_slice %103 {offsets = [0, 128], sizes = [1, 128], strides = [1, 1]} : vector<1x512xf32> to vector<1x128xf32>
    %111 = arith.negf %110 : vector<1x128xf32>
    %112 = math.exp %111 : vector<1x128xf32>
    %cst_35 = arith.constant 1.000000e+00 : f32
    %113 = vector.broadcast %cst_35 : f32 to vector<1x128xf32>
    %114 = arith.addf %113, %112 : vector<1x128xf32>
    %115 = arith.divf %113, %114 : vector<1x128xf32>
    %116 = vector.extract_strided_slice %103 {offsets = [0, 256], sizes = [1, 128], strides = [1, 1]} : vector<1x512xf32> to vector<1x128xf32>
    %117 = math.tanh %116 : vector<1x128xf32>
    %118 = vector.extract_strided_slice %103 {offsets = [0, 384], sizes = [1, 128], strides = [1, 1]} : vector<1x512xf32> to vector<1x128xf32>
    %119 = arith.negf %118 : vector<1x128xf32>
    %120 = math.exp %119 : vector<1x128xf32>
    %cst_36 = arith.constant 1.000000e+00 : f32
    %121 = vector.broadcast %cst_36 : f32 to vector<1x128xf32>
    %122 = arith.addf %121, %120 : vector<1x128xf32>
    %123 = arith.divf %121, %122 : vector<1x128xf32>
    %124 = arith.mulf %115, %96 : vector<1x128xf32>
    %125 = arith.mulf %109, %117 : vector<1x128xf32>
    %126 = arith.addf %124, %125 : vector<1x128xf32>
    %127 = math.tanh %126 : vector<1x128xf32>
    %128 = arith.mulf %123, %127 : vector<1x128xf32>
    %c4_i32 = arith.constant 4 : i32
    %129 = arith.index_cast %c4_i32 : i32 to index
    %c0_37 = arith.constant 0 : index
    %130 = vector.load %arg7[%129, %c0_37] : memref<8x512xf32, #tpu.memory_space<vmem>>, vector<1x512xf32>
    %c0_38 = arith.constant 0 : index
    %c0_39 = arith.constant 0 : index
    %131 = vector.load %arg2[%c0_38, %c0_39] : memref<128x512xf32, #tpu.memory_space<vmem>>, vector<128x512xf32>
    %cst_40 = arith.constant dense<0.000000e+00> : vector<1x512xf32>
    %132 = tpu.matmul %128, %131, %cst_40 {dimension_numbers = #tpu.dot_dimension_numbers<[1], [0], [0], [1], [0, 0, 1, 1], [], []>} : vector<1x128xf32>, vector<128x512xf32>, vector<1x512xf32> -> vector<1x512xf32>
    %133 = arith.addf %130, %132 : vector<1x512xf32>
    %134 = vector.extract_strided_slice %133 {offsets = [0, 0], sizes = [1, 128], strides = [1, 1]} : vector<1x512xf32> to vector<1x128xf32>
    %135 = arith.negf %134 : vector<1x128xf32>
    %136 = math.exp %135 : vector<1x128xf32>
    %cst_41 = arith.constant 1.000000e+00 : f32
    %137 = vector.broadcast %cst_41 : f32 to vector<1x128xf32>
    %138 = arith.addf %137, %136 : vector<1x128xf32>
    %139 = arith.divf %137, %138 : vector<1x128xf32>
    %140 = vector.extract_strided_slice %133 {offsets = [0, 128], sizes = [1, 128], strides = [1, 1]} : vector<1x512xf32> to vector<1x128xf32>
    %141 = arith.negf %140 : vector<1x128xf32>
    %142 = math.exp %141 : vector<1x128xf32>
    %cst_42 = arith.constant 1.000000e+00 : f32
    %143 = vector.broadcast %cst_42 : f32 to vector<1x128xf32>
    %144 = arith.addf %143, %142 : vector<1x128xf32>
    %145 = arith.divf %143, %144 : vector<1x128xf32>
    %146 = vector.extract_strided_slice %133 {offsets = [0, 256], sizes = [1, 128], strides = [1, 1]} : vector<1x512xf32> to vector<1x128xf32>
    %147 = math.tanh %146 : vector<1x128xf32>
    %148 = vector.extract_strided_slice %133 {offsets = [0, 384], sizes = [1, 128], strides = [1, 1]} : vector<1x512xf32> to vector<1x128xf32>
    %149 = arith.negf %148 : vector<1x128xf32>
    %150 = math.exp %149 : vector<1x128xf32>
    %cst_43 = arith.constant 1.000000e+00 : f32
    %151 = vector.broadcast %cst_43 : f32 to vector<1x128xf32>
    %152 = arith.addf %151, %150 : vector<1x128xf32>
    %153 = arith.divf %151, %152 : vector<1x128xf32>
    %154 = arith.mulf %145, %126 : vector<1x128xf32>
    %155 = arith.mulf %139, %147 : vector<1x128xf32>
    %156 = arith.addf %154, %155 : vector<1x128xf32>
    %157 = math.tanh %156 : vector<1x128xf32>
    %158 = arith.mulf %153, %157 : vector<1x128xf32>
    %c5_i32 = arith.constant 5 : i32
    %159 = arith.index_cast %c5_i32 : i32 to index
    %c0_44 = arith.constant 0 : index
    %160 = vector.load %arg7[%159, %c0_44] : memref<8x512xf32, #tpu.memory_space<vmem>>, vector<1x512xf32>
    %c0_45 = arith.constant 0 : index
    %c0_46 = arith.constant 0 : index
    %161 = vector.load %arg2[%c0_45, %c0_46] : memref<128x512xf32, #tpu.memory_space<vmem>>, vector<128x512xf32>
    %cst_47 = arith.constant dense<0.000000e+00> : vector<1x512xf32>
    %162 = tpu.matmul %158, %161, %cst_47 {dimension_numbers = #tpu.dot_dimension_numbers<[1], [0], [0], [1], [0, 0, 1, 1], [], []>} : vector<1x128xf32>, vector<128x512xf32>, vector<1x512xf32> -> vector<1x512xf32>
    %163 = arith.addf %160, %162 : vector<1x512xf32>
    %164 = vector.extract_strided_slice %163 {offsets = [0, 0], sizes = [1, 128], strides = [1, 1]} : vector<1x512xf32> to vector<1x128xf32>
    %165 = arith.negf %164 : vector<1x128xf32>
    %166 = math.exp %165 : vector<1x128xf32>
    %cst_48 = arith.constant 1.000000e+00 : f32
    %167 = vector.broadcast %cst_48 : f32 to vector<1x128xf32>
    %168 = arith.addf %167, %166 : vector<1x128xf32>
    %169 = arith.divf %167, %168 : vector<1x128xf32>
    %170 = vector.extract_strided_slice %163 {offsets = [0, 128], sizes = [1, 128], strides = [1, 1]} : vector<1x512xf32> to vector<1x128xf32>
    %171 = arith.negf %170 : vector<1x128xf32>
    %172 = math.exp %171 : vector<1x128xf32>
    %cst_49 = arith.constant 1.000000e+00 : f32
    %173 = vector.broadcast %cst_49 : f32 to vector<1x128xf32>
    %174 = arith.addf %173, %172 : vector<1x128xf32>
    %175 = arith.divf %173, %174 : vector<1x128xf32>
    %176 = vector.extract_strided_slice %163 {offsets = [0, 256], sizes = [1, 128], strides = [1, 1]} : vector<1x512xf32> to vector<1x128xf32>
    %177 = math.tanh %176 : vector<1x128xf32>
    %178 = vector.extract_strided_slice %163 {offsets = [0, 384], sizes = [1, 128], strides = [1, 1]} : vector<1x512xf32> to vector<1x128xf32>
    %179 = arith.negf %178 : vector<1x128xf32>
    %180 = math.exp %179 : vector<1x128xf32>
    %cst_50 = arith.constant 1.000000e+00 : f32
    %181 = vector.broadcast %cst_50 : f32 to vector<1x128xf32>
    %182 = arith.addf %181, %180 : vector<1x128xf32>
    %183 = arith.divf %181, %182 : vector<1x128xf32>
    %184 = arith.mulf %175, %156 : vector<1x128xf32>
    %185 = arith.mulf %169, %177 : vector<1x128xf32>
    %186 = arith.addf %184, %185 : vector<1x128xf32>
    %187 = math.tanh %186 : vector<1x128xf32>
    %188 = arith.mulf %183, %187 : vector<1x128xf32>
    %c6_i32 = arith.constant 6 : i32
    %189 = arith.index_cast %c6_i32 : i32 to index
    %c0_51 = arith.constant 0 : index
    %190 = vector.load %arg7[%189, %c0_51] : memref<8x512xf32, #tpu.memory_space<vmem>>, vector<1x512xf32>
    %c0_52 = arith.constant 0 : index
    %c0_53 = arith.constant 0 : index
    %191 = vector.load %arg2[%c0_52, %c0_53] : memref<128x512xf32, #tpu.memory_space<vmem>>, vector<128x512xf32>
    %cst_54 = arith.constant dense<0.000000e+00> : vector<1x512xf32>
    %192 = tpu.matmul %188, %191, %cst_54 {dimension_numbers = #tpu.dot_dimension_numbers<[1], [0], [0], [1], [0, 0, 1, 1], [], []>} : vector<1x128xf32>, vector<128x512xf32>, vector<1x512xf32> -> vector<1x512xf32>
    %193 = arith.addf %190, %192 : vector<1x512xf32>
    %194 = vector.extract_strided_slice %193 {offsets = [0, 0], sizes = [1, 128], strides = [1, 1]} : vector<1x512xf32> to vector<1x128xf32>
    %195 = arith.negf %194 : vector<1x128xf32>
    %196 = math.exp %195 : vector<1x128xf32>
    %cst_55 = arith.constant 1.000000e+00 : f32
    %197 = vector.broadcast %cst_55 : f32 to vector<1x128xf32>
    %198 = arith.addf %197, %196 : vector<1x128xf32>
    %199 = arith.divf %197, %198 : vector<1x128xf32>
    %200 = vector.extract_strided_slice %193 {offsets = [0, 128], sizes = [1, 128], strides = [1, 1]} : vector<1x512xf32> to vector<1x128xf32>
    %201 = arith.negf %200 : vector<1x128xf32>
    %202 = math.exp %201 : vector<1x128xf32>
    %cst_56 = arith.constant 1.000000e+00 : f32
    %203 = vector.broadcast %cst_56 : f32 to vector<1x128xf32>
    %204 = arith.addf %203, %202 : vector<1x128xf32>
    %205 = arith.divf %203, %204 : vector<1x128xf32>
    %206 = vector.extract_strided_slice %193 {offsets = [0, 256], sizes = [1, 128], strides = [1, 1]} : vector<1x512xf32> to vector<1x128xf32>
    %207 = math.tanh %206 : vector<1x128xf32>
    %208 = vector.extract_strided_slice %193 {offsets = [0, 384], sizes = [1, 128], strides = [1, 1]} : vector<1x512xf32> to vector<1x128xf32>
    %209 = arith.negf %208 : vector<1x128xf32>
    %210 = math.exp %209 : vector<1x128xf32>
    %cst_57 = arith.constant 1.000000e+00 : f32
    %211 = vector.broadcast %cst_57 : f32 to vector<1x128xf32>
    %212 = arith.addf %211, %210 : vector<1x128xf32>
    %213 = arith.divf %211, %212 : vector<1x128xf32>
    %214 = arith.mulf %205, %186 : vector<1x128xf32>
    %215 = arith.mulf %199, %207 : vector<1x128xf32>
    %216 = arith.addf %214, %215 : vector<1x128xf32>
    %217 = math.tanh %216 : vector<1x128xf32>
    %218 = arith.mulf %213, %217 : vector<1x128xf32>
    %c7_i32 = arith.constant 7 : i32
    %219 = arith.index_cast %c7_i32 : i32 to index
    %c0_58 = arith.constant 0 : index
    %220 = vector.load %arg7[%219, %c0_58] : memref<8x512xf32, #tpu.memory_space<vmem>>, vector<1x512xf32>
    %c0_59 = arith.constant 0 : index
    %c0_60 = arith.constant 0 : index
    %221 = vector.load %arg2[%c0_59, %c0_60] : memref<128x512xf32, #tpu.memory_space<vmem>>, vector<128x512xf32>
    %cst_61 = arith.constant dense<0.000000e+00> : vector<1x512xf32>
    %222 = tpu.matmul %218, %221, %cst_61 {dimension_numbers = #tpu.dot_dimension_numbers<[1], [0], [0], [1], [0, 0, 1, 1], [], []>} : vector<1x128xf32>, vector<128x512xf32>, vector<1x512xf32> -> vector<1x512xf32>
    %223 = arith.addf %220, %222 : vector<1x512xf32>
    %224 = vector.extract_strided_slice %223 {offsets = [0, 0], sizes = [1, 128], strides = [1, 1]} : vector<1x512xf32> to vector<1x128xf32>
    %225 = arith.negf %224 : vector<1x128xf32>
    %226 = math.exp %225 : vector<1x128xf32>
    %cst_62 = arith.constant 1.000000e+00 : f32
    %227 = vector.broadcast %cst_62 : f32 to vector<1x128xf32>
    %228 = arith.addf %227, %226 : vector<1x128xf32>
    %229 = arith.divf %227, %228 : vector<1x128xf32>
    %230 = vector.extract_strided_slice %223 {offsets = [0, 128], sizes = [1, 128], strides = [1, 1]} : vector<1x512xf32> to vector<1x128xf32>
    %231 = arith.negf %230 : vector<1x128xf32>
    %232 = math.exp %231 : vector<1x128xf32>
    %cst_63 = arith.constant 1.000000e+00 : f32
    %233 = vector.broadcast %cst_63 : f32 to vector<1x128xf32>
    %234 = arith.addf %233, %232 : vector<1x128xf32>
    %235 = arith.divf %233, %234 : vector<1x128xf32>
    %236 = vector.extract_strided_slice %223 {offsets = [0, 256], sizes = [1, 128], strides = [1, 1]} : vector<1x512xf32> to vector<1x128xf32>
    %237 = math.tanh %236 : vector<1x128xf32>
    %238 = vector.extract_strided_slice %223 {offsets = [0, 384], sizes = [1, 128], strides = [1, 1]} : vector<1x512xf32> to vector<1x128xf32>
    %239 = arith.negf %238 : vector<1x128xf32>
    %240 = math.exp %239 : vector<1x128xf32>
    %cst_64 = arith.constant 1.000000e+00 : f32
    %241 = vector.broadcast %cst_64 : f32 to vector<1x128xf32>
    %242 = arith.addf %241, %240 : vector<1x128xf32>
    %243 = arith.divf %241, %242 : vector<1x128xf32>
    %244 = arith.mulf %235, %216 : vector<1x128xf32>
    %245 = arith.mulf %229, %237 : vector<1x128xf32>
    %246 = arith.addf %244, %245 : vector<1x128xf32>
    %247 = math.tanh %246 : vector<1x128xf32>
    %248 = arith.mulf %243, %247 : vector<1x128xf32>
    %c8_i32 = arith.constant 8 : i32
    %c0_65 = arith.constant 0 : index
    %c0_66 = arith.constant 0 : index
    %249 = vector.load %arg4[%c0_65, %c0_66] : memref<1x128xf32, #tpu.memory_space<vmem>>, vector<1x128xf32>
    %250 = arith.mulf %248, %249 : vector<1x128xf32>
    %cst_67 = arith.constant dense<0.000000e+00> : vector<1xf32>
    %251 = vector.multi_reduction <add>, %250, %cst_67 [1] : vector<1x128xf32> to vector<1xf32>
    %252 = vector.shape_cast %251 : vector<1xf32> to vector<1x1xf32>
    %c0_68 = arith.constant 0 : index
    %c0_69 = arith.constant 0 : index
    %253 = vector.load %arg5[%c0_68, %c0_69] : memref<1x1xf32, #tpu.memory_space<vmem>>, vector<1x1xf32>
    %254 = arith.addf %252, %253 : vector<1x1xf32>
    %c0_70 = arith.constant 0 : index
    %c0_71 = arith.constant 0 : index
    %255 = vector.load %arg6[%c0_70, %c0_71] : memref<1x1xf32, #tpu.memory_space<vmem>>, vector<1x1xf32>
    tpu.vector_store %arg6[%c0_70, %c0_71], %254 {strides = array<i32>} : memref<1x1xf32, #tpu.memory_space<vmem>>, vector<1x1xf32>,
    return
  }
}

</mosaic_0001>

<llo_original>
// kernel: tpu_custom_call.1
$region0: #{tpu_custom_call.1}
  #allocation0 [shape = 'u32[]', space=smem, size = 0x4, offset = 0x4, fixed_abs, tag = 'smem constant byte address 0x4 - core index']
  #allocation1 [shape = 'u32[144,128]{1,0:T(1,128)}', space=vmem, size = 0x12000, scoped, tag = 'internal scratch']
  #allocation2 [shape = 'f32[8,512]{1,0:T(8,128)}', space=vmem, size = 0x4000, scoped, tag = 'scratch operand']
  #allocation3 [shape = 'f32[1,1]{1,0:T(1,128)S(1)}', space=vmem, size = 0x200, scoped, tag = 'scoped memory for tpu_custom_call.1']
  %s0 = inlined_call_operand.vmem [shape: f32[8,4], index: 0, kind: input, shape index: {}]
  %s1 = inlined_call_operand.hbm [shape: f32[4,512], index: 1, kind: input, shape index: {}]
  %s2 = inlined_call_operand.hbm [shape: f32[128,512], index: 2, kind: input, shape index: {}]
  %s3 = inlined_call_operand.vmem [shape: f32[1,512], index: 3, kind: input, shape index: {}]
  %s4 = inlined_call_operand.vmem [shape: f32[1,128], index: 4, kind: input, shape index: {}]
  %s5 = inlined_call_operand.<no memory space> [shape: f32[1,1], index: 5, kind: input, shape index: {}]
  %s6 = inlined_call_operand.hbm [shape: f32[1,1], index: 6, kind: output, shape index: {}]
  %s7 = sld [smem:[#allocation0]]
  $region42: #{tpu_custom_call.1} parent=0
    _
  %s9 = ssub.s32 1, %s7
  %s10 = scalar_select 0, %s9, %s7
  %v11 = vstv %s5
  %12 = vst [vmem:[#allocation3] sm:$0x1] %v11
  $region1: #{tpu_custom_call.1} parent=0
    #allocation4 [shape = 'u8[8192]{0}', space=vmem, size = 0x2000, scoped, tag = 'input window, operand 1, single buffered']
    #allocation5 [shape = 's32[1]{0}', space=sflag, size = 0x4, scoped, tag = 'scoped memory for tpu_custom_call.1']
    #allocation6 [shape = 's32[1]{0}', space=sflag, size = 0x4, scoped, tag = 'scoped memory for tpu_custom_call.1']
    #allocation7 [shape = 'u8[262144]{0}', space=vmem, size = 0x40000, scoped, tag = 'input window, operand 2, single buffered']
    #allocation8 [shape = 's32[1]{0}', space=sflag, size = 0x4, scoped, tag = 'scoped memory for tpu_custom_call.1']
    #allocation9 [shape = 'u8[512]{0}', space=vmem, size = 0x400, scoped, tag = 'output window, operand 0, single buffered']
    %13 = vsyncpa [#allocation5], 0
    %14 = vsyncpa [#allocation8], 0
    %15 = vsyncpa [#allocation6], 0
    // Predicated region
    $region2: #{tpu_custom_call.1} parent=1 // pred_check
      _
    $region3: #{tpu_custom_call.1} parent=1 // pred_check_branch
      %17 = sbr.rel (0) target = $region5
    $region4: #{tpu_custom_call.1} parent=1 // pred_region
      _
    $region5: #{tpu_custom_call.1} parent=1 // pred_fallthru
      _
    // Predicated region
    $region6: #{tpu_custom_call.1} parent=1 // pred_check
      _
    $region7: #{tpu_custom_call.1} parent=1 // pred_check_branch
      %19 = sbr.rel (0) target = $region9
    $region8: #{tpu_custom_call.1} parent=1 // pred_region
      %s21 = ssub.s32 256, 256
      %22 = vsyncadd [#allocation5], %s21
      %s24 = sshll.u32 [#allocation4], 4
      %s25 = int_to_ptr.vmem [resolvable:$true] %s24
      %27 = dma.hbm_to_vmem [thread:$0]  %s1, 256, %s25, [#allocation5]
    $region9: #{tpu_custom_call.1} parent=1 // pred_fallthru
      _
    // Predicated region
    $region10: #{tpu_custom_call.1} parent=1 // pred_check
      _
    $region11: #{tpu_custom_call.1} parent=1 // pred_check_branch
      %29 = sbr.rel (0) target = $region13
    $region12: #{tpu_custom_call.1} parent=1 // pred_region
      %s31 = ssub.s32 8192, 8192
      %32 = vsyncadd [#allocation8], %s31
      %s33 = sshll.u32 [#allocation7], 4
      %s34 = int_to_ptr.vmem [resolvable:$true] %s33
      %39 = dma.hbm_to_vmem [thread:$0]  %s2, 8192, %s34, [#allocation8], 512, 512, 32
    $region13: #{tpu_custom_call.1} parent=1 // pred_fallthru
      _
    // Predicated region
    $region14: #{tpu_custom_call.1} parent=1 // pred_check
      _
    $region15: #{tpu_custom_call.1} parent=1 // pred_check_branch
      %41 = sbr.rel (0) target = $region17
    $region16: #{tpu_custom_call.1} parent=1 // pred_region
      _
    $region17: #{tpu_custom_call.1} parent=1 // pred_fallthru
      _
    // Predicated region
    $region18: #{tpu_custom_call.1} parent=1 // pred_check
      _
    $region19: #{tpu_custom_call.1} parent=1 // pred_check_branch
      %43 = sbr.rel (0) target = $region21
    $region20: #{tpu_custom_call.1} parent=1 // pred_region
      _
    $region21: #{tpu_custom_call.1} parent=1 // pred_fallthru
      _
    // Predicated region
    $region22: #{tpu_custom_call.1} parent=1 // pred_check
      _
    $region23: #{tpu_custom_call.1} parent=1 // pred_check_branch
      %45 = sbr.rel (0) target = $region25
    $region24: #{tpu_custom_call.1} parent=1 // pred_region
      _
    $region25: #{tpu_custom_call.1} parent=1 // pred_fallthru
      _
    // Predicated region
    $region26: #{tpu_custom_call.1} parent=1 // pred_check
      _
    $region27: #{tpu_custom_call.1} parent=1 // pred_check_branch
      %47 = sbr.rel (0) target = $region29
    $region28: #{tpu_custom_call.1} parent=1 // pred_region
      %48 = dma.done [#allocation5], 256
    $region29: #{tpu_custom_call.1} parent=1 // pred_fallthru
      _
    // Predicated region
    $region30: #{tpu_custom_call.1} parent=1 // pred_check
      _
    $region31: #{tpu_custom_call.1} parent=1 // pred_check_branch
      %50 = sbr.rel (0) target = $region33
    $region32: #{tpu_custom_call.1} parent=1 // pred_region
      %51 = dma.done [#allocation8], 8192
    $region33: #{tpu_custom_call.1} parent=1 // pred_fallthru
      _
    %v52 = vld [vmem:[%s0] sm:$0xff]
    %v53 = vld [vmem:[#allocation4] sm:$0xff]
    %v54 = vld [vmem:[#allocation4 + $0x8] sm:$0xff]
    %v55 = vld [vmem:[%s3] sm:$0xf]
    %v57 = vlaneseq
    %v58 = vshrl.u32 %v57, 7
    %v59 = vsub.s32 0, %v58
    %v60 = vrot.slane %v55, %v59
    %v61 = vlaneseq
    %v62 = vshrl.u32 %v61, 7
    %v63 = vsub.s32 1, %v62
    %v64 = vrot.slane %v55, %v63
    %v65 = vlaneseq
    %v66 = vshrl.u32 %v65, 7
    %v67 = vsub.s32 2, %v66
    %v68 = vrot.slane %v55, %v67
    %v69 = vlaneseq
    %v70 = vshrl.u32 %v69, 7
    %v71 = vsub.s32 3, %v70
    %v72 = vrot.slane %v55, %v71
    %v79 = vcombine.high %v53, %v53
    %v80 = vcombine.high %v54, %v54
    %vm81 = vcmask 31744
    %v83 = vsel %vm81, %v52, 0
    %vm85 = vcmask 1043456
    %v86 = vsel %vm85, %v53, 0
    %v88 = vsel %vm85, %v79, 0
    %v90 = vsel %vm85, %v54, 0
    %v92 = vsel %vm85, %v80, 0
    %94 = vmatprep.subr.mxu0 0.0
    %95 = vmatpush1.msra.mxu0 0.0
    %96 = vmatprep.subr.mxu0 0.0
    %97 = vmatpush1.msra.mxu0 0.0
    %98 = vmatprep.subr.mxu0 0.0
    %99 = vmatpush1.msra.mxu0 0.0
    %100 = vmatprep.subr.mxu0 0.0
    %101 = vmatpush1.msra.mxu0 0.0
    %102 = vmatprep.subr.mxu0 0.0
    %103 = vmatpush1.msra.mxu0 0.0
    %104 = vmatprep.subr.mxu0 0.0
    %105 = vmatpush1.msra.mxu0 0.0
    %106 = vmatprep.subr.mxu0 0.0
    %107 = vmatpush1.msra.mxu0 0.0
    %108 = vmatprep.subr.mxu0 0.0
    %109 = vmatpush1.msra.mxu0 0.0
    %110 = vmatprep.subr.mxu0 0.0
    %111 = vmatpush1.msra.mxu0 0.0
    %112 = vmatprep.subr.mxu0 0.0
    %113 = vmatpush1.msra.mxu0 0.0
    %114 = vmatprep.subr.mxu0 0.0
    %115 = vmatpush1.msra.mxu0 0.0
    %116 = vmatprep.subr.mxu0 0.0
    %117 = vmatpush1.msra.mxu0 0.0
    %118 = vmatprep.subr.mxu0 0.0
    %119 = vmatpush1.msra.mxu0 0.0
    %120 = vmatprep.subr.mxu0 0.0
    %121 = vmatpush1.msra.mxu0 0.0
    %122 = vmatprep.subr.mxu0 0.0
    %123 = vmatpush1.msra.mxu0 0.0
    %124 = vmatprep.subr.mxu0 %v88
    %125 = vmatpush1.msra.mxu0 %v86
    %126 = vmatprep.subr.mxu0 0.0
    %127 = vmatpush2.msra.mxu0 0.0
    %128 = vmatprep.subr.mxu0 0.0
    %129 = vmatpush2.msra.mxu0 0.0
    %130 = vmatprep.subr.mxu0 0.0
    %131 = vmatpush2.msra.mxu0 0.0
    %132 = vmatprep.subr.mxu0 0.0
    %133 = vmatpush2.msra.mxu0 0.0
    %134 = vmatprep.subr.mxu0 0.0
    %135 = vmatpush2.msra.mxu0 0.0
    %136 = vmatprep.subr.mxu0 0.0
    %137 = vmatpush2.msra.mxu0 0.0
    %138 = vmatprep.subr.mxu0 0.0
    %139 = vmatpush2.msra.mxu0 0.0
    %140 = vmatprep.subr.mxu0 0.0
    %141 = vmatpush2.msra.mxu0 0.0
    %142 = vmatprep.subr.mxu0 0.0
    %143 = vmatpush2.msra.mxu0 0.0
    %144 = vmatprep.subr.mxu0 0.0
    %145 = vmatpush2.msra.mxu0 0.0
    %146 = vmatprep.subr.mxu0 0.0
    %147 = vmatpush2.msra.mxu0 0.0
    %148 = vmatprep.subr.mxu0 0.0
    %149 = vmatpush2.msra.mxu0 0.0
    %150 = vmatprep.subr.mxu0 0.0
    %151 = vmatpush2.msra.mxu0 0.0
    %152 = vmatprep.subr.mxu0 0.0
    %153 = vmatpush2.msra.mxu0 0.0
    %154 = vmatprep.subr.mxu0 0.0
    %155 = vmatpush2.msra.mxu0 0.0
    %156 = vmatprep.subr.mxu0 0.0
    %157 = vmatpush2.msra.mxu0 0.0
    %158 = vmatprep.mubr.f32.mxu0 0.0
    %159 = vmatmul.mubr.f32.gmra.mxu0 %v83
    %v160 = vpop.f32.mrf.mxu0
    %v161 = vadd.f32 %v60, %v160
    %v162 = vpop.f32.mrf.mxu0
    %v163 = vadd.f32 %v64, %v162
    %164 = vdwg.mxu0
    %165 = vmatprep.subr.mxu0 0.0
    %166 = vmatpush1.msra.mxu0 0.0
    %167 = vmatprep.subr.mxu0 0.0
    %168 = vmatpush1.msra.mxu0 0.0
    %169 = vmatprep.subr.mxu0 0.0
    %170 = vmatpush1.msra.mxu0 0.0
    %171 = vmatprep.subr.mxu0 0.0
    %172 = vmatpush1.msra.mxu0 0.0
    %173 = vmatprep.subr.mxu0 0.0
    %174 = vmatpush1.msra.mxu0 0.0
    %175 = vmatprep.subr.mxu0 0.0
    %176 = vmatpush1.msra.mxu0 0.0
    %177 = vmatprep.subr.mxu0 0.0
    %178 = vmatpush1.msra.mxu0 0.0
    %179 = vmatprep.subr.mxu0 0.0
    %180 = vmatpush1.msra.mxu0 0.0
    %181 = vmatprep.subr.mxu0 0.0
    %182 = vmatpush1.msra.mxu0 0.0
    %183 = vmatprep.subr.mxu0 0.0
    %184 = vmatpush1.msra.mxu0 0.0
    %185 = vmatprep.subr.mxu0 0.0
    %186 = vmatpush1.msra.mxu0 0.0
    %187 = vmatprep.subr.mxu0 0.0
    %188 = vmatpush1.msra.mxu0 0.0
    %189 = vmatprep.subr.mxu0 0.0
    %190 = vmatpush1.msra.mxu0 0.0
    %191 = vmatprep.subr.mxu0 0.0
    %192 = vmatpush1.msra.mxu0 0.0
    %193 = vmatprep.subr.mxu0 0.0
    %194 = vmatpush1.msra.mxu0 0.0
    %195 = vmatprep.subr.mxu0 %v92
    %196 = vmatpush1.msra.mxu0 %v90
    %197 = vmatprep.subr.mxu0 0.0
    %198 = vmatpush2.msra.mxu0 0.0
    %199 = vmatprep.subr.mxu0 0.0
    %200 = vmatpush2.msra.mxu0 0.0
    %201 = vmatprep.subr.mxu0 0.0
    %202 = vmatpush2.msra.mxu0 0.0
    %203 = vmatprep.subr.mxu0 0.0
    %204 = vmatpush2.msra.mxu0 0.0
    %205 = vmatprep.subr.mxu0 0.0
    %206 = vmatpush2.msra.mxu0 0.0
    %207 = vmatprep.subr.mxu0 0.0
    %208 = vmatpush2.msra.mxu0 0.0
    %209 = vmatprep.subr.mxu0 0.0
    %210 = vmatpush2.msra.mxu0 0.0
    %211 = vmatprep.subr.mxu0 0.0
    %212 = vmatpush2.msra.mxu0 0.0
    %213 = vmatprep.subr.mxu0 0.0
    %214 = vmatpush2.msra.mxu0 0.0
    %215 = vmatprep.subr.mxu0 0.0
    %216 = vmatpush2.msra.mxu0 0.0
    %217 = vmatprep.subr.mxu0 0.0
    %218 = vmatpush2.msra.mxu0 0.0
    %219 = vmatprep.subr.mxu0 0.0
    %220 = vmatpush2.msra.mxu0 0.0
    %221 = vmatprep.subr.mxu0 0.0
    %222 = vmatpush2.msra.mxu0 0.0
    %223 = vmatprep.subr.mxu0 0.0
    %224 = vmatpush2.msra.mxu0 0.0
    %225 = vmatprep.subr.mxu0 0.0
    %226 = vmatpush2.msra.mxu0 0.0
    %227 = vmatprep.subr.mxu0 0.0
    %228 = vmatpush2.msra.mxu0 0.0
    %229 = vmatprep.mubr.f32.mxu0 0.0
    %230 = vmatmul.mubr.f32.gmra.mxu0 %v83
    %v231 = vpop.f32.mrf.mxu0
    %v232 = vadd.f32 %v68, %v231
    %v233 = vpop.f32.mrf.mxu0
    %v234 = vadd.f32 %v72, %v233
    %235 = vdwg.mxu0
    %236 = vst [vmem:[#allocation2] sm:$0xff] %v161
    %237 = vst [vmem:[#allocation2 + $0x8] sm:$0xff] %v163
    %238 = vst [vmem:[#allocation2 + $0x10] sm:$0xff] %v232
    %239 = vst [vmem:[#allocation2 + $0x18] sm:$0xff] %v234
    %v240 = vld [vmem:[#allocation2] ss:$8 sm:$0xf]
    %v241 = vld [vmem:[#allocation7] sm:$0xff]
    %v242 = vld [vmem:[#allocation7 + $0x8] sm:$0xff]
    %v243 = vld [vmem:[#allocation7 + $0x10] sm:$0xff]
    %v244 = vld [vmem:[#allocation7 + $0x18] sm:$0xff]
    %v245 = vld [vmem:[#allocation7 + $0x20] sm:$0xff]
    %v246 = vld [vmem:[#allocation7 + $0x28] sm:$0xff]
    %v247 = vld [vmem:[#allocation7 + $0x30] sm:$0xff]
    %v248 = vld [vmem:[#allocation7 + $0x38] sm:$0xff]
    %v249 = vld [vmem:[#allocation7 + $0x40] sm:$0xff]
    %v250 = vld [vmem:[#allocation7 + $0x48] sm:$0xff]
    %v251 = vld [vmem:[#allocation7 + $0x50] sm:$0xff]
    %v252 = vld [vmem:[#allocation7 + $0x58] sm:$0xff]
    %v253 = vld [vmem:[#allocation7 + $0x60] sm:$0xff]
    %v254 = vld [vmem:[#allocation7 + $0x68] sm:$0xff]
    %v255 = vld [vmem:[#allocation7 + $0x70] sm:$0xff]
    %v256 = vld [vmem:[#allocation7 + $0x78] sm:$0xff]
    %v257 = vld [vmem:[#allocation7 + $0x80] sm:$0xff]
    %v258 = vld [vmem:[#allocation7 + $0x88] sm:$0xff]
    %v259 = vld [vmem:[#allocation7 + $0x90] sm:$0xff]
    %v260 = vld [vmem:[#allocation7 + $0x98] sm:$0xff]
    %v261 = vld [vmem:[#allocation7 + $0xa0] sm:$0xff]
    %v262 = vld [vmem:[#allocation7 + $0xa8] sm:$0xff]
    %v263 = vld [vmem:[#allocation7 + $0xb0] sm:$0xff]
    %v264 = vld [vmem:[#allocation7 + $0xb8] sm:$0xff]
    %v265 = vld [vmem:[#allocation7 + $0xc0] sm:$0xff]
    %v266 = vld [vmem:[#allocation7 + $0xc8] sm:$0xff]
    %v267 = vld [vmem:[#allocation7 + $0xd0] sm:$0xff]
    %v268 = vld [vmem:[#allocation7 + $0xd8] sm:$0xff]
    %v269 = vld [vmem:[#allocation7 + $0xe0] sm:$0xff]
    %v270 = vld [vmem:[#allocation7 + $0xe8] sm:$0xff]
    %v271 = vld [vmem:[#allocation7 + $0xf0] sm:$0xff]
    %v272 = vld [vmem:[#allocation7 + $0xf8] sm:$0xff]
    %v273 = vld [vmem:[#allocation7 + $0x100] sm:$0xff]
    %v274 = vld [vmem:[#allocation7 + $0x108] sm:$0xff]
    %v275 = vld [vmem:[#allocation7 + $0x110] sm:$0xff]
    %v276 = vld [vmem:[#allocation7 + $0x118] sm:$0xff]
    %v277 = vld [vmem:[#allocation7 + $0x120] sm:$0xff]
    %v278 = vld [vmem:[#allocation7 + $0x128] sm:$0xff]
    %v279 = vld [vmem:[#allocation7 + $0x130] sm:$0xff]
    %v280 = vld [vmem:[#allocation7 + $0x138] sm:$0xff]
    %v281 = vld [vmem:[#allocation7 + $0x140] sm:$0xff]
    %v282 = vld [vmem:[#allocation7 + $0x148] sm:$0xff]
    %v283 = vld [vmem:[#allocation7 + $0x150] sm:$0xff]
    %v284 = vld [vmem:[#allocation7 + $0x158] sm:$0xff]
    %v285 = vld [vmem:[#allocation7 + $0x160] sm:$0xff]
    %v286 = vld [vmem:[#allocation7 + $0x168] sm:$0xff]
    %v287 = vld [vmem:[#allocation7 + $0x170] sm:$0xff]
    %v288 = vld [vmem:[#allocation7 + $0x178] sm:$0xff]
    %v289 = vld [vmem:[#allocation7 + $0x180] sm:$0xff]
    %v290 = vld [vmem:[#allocation7 + $0x188] sm:$0xff]
    %v291 = vld [vmem:[#allocation7 + $0x190] sm:$0xff]
    %v292 = vld [vmem:[#allocation7 + $0x198] sm:$0xff]
    %v293 = vld [vmem:[#allocation7 + $0x1a0] sm:$0xff]
    %v294 = vld [vmem:[#allocation7 + $0x1a8] sm:$0xff]
    %v295 = vld [vmem:[#allocation7 + $0x1b0] sm:$0xff]
    %v296 = vld [vmem:[#allocation7 + $0x1b8] sm:$0xff]
    %v297 = vld [vmem:[#allocation7 + $0x1c0] sm:$0xff]
    %v298 = vld [vmem:[#allocation7 + $0x1c8] sm:$0xff]
    %v299 = vld [vmem:[#allocation7 + $0x1d0] sm:$0xff]
    %v300 = vld [vmem:[#allocation7 + $0x1d8] sm:$0xff]
    %v301 = vld [vmem:[#allocation7 + $0x1e0] sm:$0xff]
    %v302 = vld [vmem:[#allocation7 + $0x1e8] sm:$0xff]
    %v303 = vld [vmem:[#allocation7 + $0x1f0] sm:$0xff]
    %v304 = vld [vmem:[#allocation7 + $0x1f8] sm:$0xff]
    %305 = vmatprep.subr.mxu0 %v302
    %306 = vmatpush1.msra.mxu0 %v301
    %307 = vmatprep.subr.mxu0 %v298
    %308 = vmatpush1.msra.mxu0 %v297
    %309 = vmatprep.subr.mxu0 %v294
    %310 = vmatpush1.msra.mxu0 %v293
    %311 = vmatprep.subr.mxu0 %v290
    %312 = vmatpush1.msra.mxu0 %v289
    %313 = vmatprep.subr.mxu0 %v286
    %314 = vmatpush1.msra.mxu0 %v285
    %315 = vmatprep.subr.mxu0 %v282
    %316 = vmatpush1.msra.mxu0 %v281
    %317 = vmatprep.subr.mxu0 %v278
    %318 = vmatpush1.msra.mxu0 %v277
    %319 = vmatprep.subr.mxu0 %v274
    %320 = vmatpush1.msra.mxu0 %v273
    %321 = vmatprep.subr.mxu0 %v270
    %322 = vmatpush1.msra.mxu0 %v269
    %323 = vmatprep.subr.mxu0 %v266
    %324 = vmatpush1.msra.mxu0 %v265
    %325 = vmatprep.subr.mxu0 %v262
    %326 = vmatpush1.msra.mxu0 %v261
    %327 = vmatprep.subr.mxu0 %v258
    %328 = vmatpush1.msra.mxu0 %v257
    %329 = vmatprep.subr.mxu0 %v254
    %330 = vmatpush1.msra.mxu0 %v253
    %331 = vmatprep.subr.mxu0 %v250
    %332 = vmatpush1.msra.mxu0 %v249
    %333 = vmatprep.subr.mxu0 %v246
    %334 = vmatpush1.msra.mxu0 %v245
    %335 = vmatprep.subr.mxu0 %v242
    %336 = vmatpush1.msra.mxu0 %v241
    %337 = vmatprep.subr.mxu0 0.0
    %338 = vmatpush2.msra.mxu0 0.0
    %339 = vmatprep.subr.mxu0 0.0
    %340 = vmatpush2.msra.mxu0 0.0
    %341 = vmatprep.subr.mxu0 0.0
    %342 = vmatpush2.msra.mxu0 0.0
    %343 = vmatprep.subr.mxu0 0.0
    %344 = vmatpush2.msra.mxu0 0.0
    %345 = vmatprep.subr.mxu0 0.0
    %346 = vmatpush2.msra.mxu0 0.0
    %347 = vmatprep.subr.mxu0 0.0
    %348 = vmatpush2.msra.mxu0 0.0
    %349 = vmatprep.subr.mxu0 0.0
    %350 = vmatpush2.msra.mxu0 0.0
    %351 = vmatprep.subr.mxu0 0.0
    %352 = vmatpush2.msra.mxu0 0.0
    %353 = vmatprep.subr.mxu0 0.0
    %354 = vmatpush2.msra.mxu0 0.0
    %355 = vmatprep.subr.mxu0 0.0
    %356 = vmatpush2.msra.mxu0 0.0
    %357 = vmatprep.subr.mxu0 0.0
    %358 = vmatpush2.msra.mxu0 0.0
    %359 = vmatprep.subr.mxu0 0.0
    %360 = vmatpush2.msra.mxu0 0.0
    %361 = vmatprep.subr.mxu0 0.0
    %362 = vmatpush2.msra.mxu0 0.0
    %363 = vmatprep.subr.mxu0 0.0
    %364 = vmatpush2.msra.mxu0 0.0
    %365 = vmatprep.subr.mxu0 0.0
    %366 = vmatpush2.msra.mxu0 0.0
    %367 = vmatprep.subr.mxu0 0.0
    %368 = vmatpush2.msra.mxu0 0.0
    %369 = vmatprep.mubr.f32.mxu0 0.0
    %370 = vmatmul.mubr.f32.gmra.mxu0 0.0
    %v371 = vpop.f32.mrf.mxu0
    %v372 = vadd.f32 0.0, %v371
    %v373 = vpop.f32.mrf.mxu0
    %v374 = vadd.f32 0.0, %v373
    %375 = vdwg.mxu0
    %376 = vmatprep.subr.mxu0 %v304
    %377 = vmatpush1.msra.mxu0 %v303
    %378 = vmatprep.subr.mxu0 %v300
    %379 = vmatpush1.msra.mxu0 %v299
    %380 = vmatprep.subr.mxu0 %v296
    %381 = vmatpush1.msra.mxu0 %v295
    %382 = vmatprep.subr.mxu0 %v292
    %383 = vmatpush1.msra.mxu0 %v291
    %384 = vmatprep.subr.mxu0 %v288
    %385 = vmatpush1.msra.mxu0 %v287
    %386 = vmatprep.subr.mxu0 %v284
    %387 = vmatpush1.msra.mxu0 %v283
    %388 = vmatprep.subr.mxu0 %v280
    %389 = vmatpush1.msra.mxu0 %v279
    %390 = vmatprep.subr.mxu0 %v276
    %391 = vmatpush1.msra.mxu0 %v275
    %392 = vmatprep.subr.mxu0 %v272
    %393 = vmatpush1.msra.mxu0 %v271
    %394 = vmatprep.subr.mxu0 %v268
    %395 = vmatpush1.msra.mxu0 %v267
    %396 = vmatprep.subr.mxu0 %v264
    %397 = vmatpush1.msra.mxu0 %v263
    %398 = vmatprep.subr.mxu0 %v260
    %399 = vmatpush1.msra.mxu0 %v259
    %400 = vmatprep.subr.mxu0 %v256
    %401 = vmatpush1.msra.mxu0 %v255
    %402 = vmatprep.subr.mxu0 %v252
    %403 = vmatpush1.msra.mxu0 %v251
    %404 = vmatprep.subr.mxu0 %v248
    %405 = vmatpush1.msra.mxu0 %v247
    %406 = vmatprep.subr.mxu0 %v244
    %407 = vmatpush1.msra.mxu0 %v243
    %408 = vmatprep.subr.mxu0 0.0
    %409 = vmatpush2.msra.mxu0 0.0
    %410 = vmatprep.subr.mxu0 0.0
    %411 = vmatpush2.msra.mxu0 0.0
    %412 = vmatprep.subr.mxu0 0.0
    %413 = vmatpush2.msra.mxu0 0.0
    %414 = vmatprep.subr.mxu0 0.0
    %415 = vmatpush2.msra.mxu0 0.0
    %416 = vmatprep.subr.mxu0 0.0
    %417 = vmatpush2.msra.mxu0 0.0
    %418 = vmatprep.subr.mxu0 0.0
    %419 = vmatpush2.msra.mxu0 0.0
    %420 = vmatprep.subr.mxu0 0.0
    %421 = vmatpush2.msra.mxu0 0.0
    %422 = vmatprep.subr.mxu0 0.0
    %423 = vmatpush2.msra.mxu0 0.0
    %424 = vmatprep.subr.mxu0 0.0
    %425 = vmatpush2.msra.mxu0 0.0
    %426 = vmatprep.subr.mxu0 0.0
    %427 = vmatpush2.msra.mxu0 0.0
    %428 = vmatprep.subr.mxu0 0.0
    %429 = vmatpush2.msra.mxu0 0.0
    %430 = vmatprep.subr.mxu0 0.0
    %431 = vmatpush2.msra.mxu0 0.0
    %432 = vmatprep.subr.mxu0 0.0
    %433 = vmatpush2.msra.mxu0 0.0
    %434 = vmatprep.subr.mxu0 0.0
    %435 = vmatpush2.msra.mxu0 0.0
    %436 = vmatprep.subr.mxu0 0.0
    %437 = vmatpush2.msra.mxu0 0.0
    %438 = vmatprep.subr.mxu0 0.0
    %439 = vmatpush2.msra.mxu0 0.0
    %440 = vmatprep.mubr.f32.mxu0 0.0
    %441 = vmatmul.mubr.f32.gmra.mxu0 0.0
    %v442 = vpop.f32.mrf.mxu0
    %v443 = vadd.f32 0.0, %v442
    %v444 = vpop.f32.mrf.mxu0
    %v445 = vadd.f32 0.0, %v444
    %446 = vdwg.mxu0
    %v451 = vcombine.low %v372, %v374
    %v452 = vcombine.low %v443, %v445
    %v454 = vunpack.c.l.s4 1966171168
    %v455 = vunpack.c.0.s8 %v454
    %v456 = vlaneseq
    %v457 = vshrl.u32 %v456, 7
    %v458 = vsub.s32 %v455, %v457
    %v459 = vrot.slane %v451, %v458
    %v461 = vunpack.c.l.s4 1966171168
    %v462 = vunpack.c.0.s8 %v461
    %v463 = vlaneseq
    %v464 = vshrl.u32 %v463, 7
    %v465 = vsub.s32 %v462, %v464
    %v466 = vrot.slane %v452, %v465
    %v467 = vcombine.low %v459, %v466
    %v469 = vunpack.c.l.s4 1966171168
    %v470 = vunpack.c.0.s8 %v469
    %v471 = vlaneseq
    %v472 = vshrl.u32 %v471, 7
    %v473 = vsub.s32 %v470, %v472
    %v474 = vrot.slane %v467, %v473
    %v476 = vadd.f32 %v240, %v474
    %v477 = vxor.u32 %v476, 2147483648
    %v478 = vmul.f32 %v477, 1.442695
    %v479 = vpow.pop %v478
    %v480 = vadd.f32 %v479, 1.0
    %v481 = vrcp.pop %v480
    %v482 = vmul.f32 1.0, %v481
    %v484 = vrot.slane %v476, 1
    %v486 = vxor.u32 %v484, 2147483648
    %v487 = vmul.f32 %v486, 1.442695
    %v488 = vpow.pop %v487
    %v489 = vadd.f32 %v488, 1.0
    %v490 = vrcp.pop %v489
    %v491 = vmul.f32 1.0, %v490
    %v492 = vrot.slane %v476, 2
    %v494 = vtanh.pop %v492
    %v495 = vrot.slane %v476, 3
    %v497 = vxor.u32 %v495, 2147483648
    %v498 = vmul.f32 %v497, 1.442695
    %v499 = vpow.pop %v498
    %v500 = vadd.f32 %v499, 1.0
    %v501 = vrcp.pop %v500
    %v502 = vmul.f32 1.0, %v501
    %v503 = vmul.f32 %v491, 0.0
    %v504 = vmul.f32 %v482, %v494
    %v505 = vadd.f32 %v503, %v504
    %v506 = vtanh.pop %v505
    %v507 = vmul.f32 %v502, %v506
    %s508 = scalar_lea.vmem [#allocation2], 1
    %v509 = vld [vmem:[%s508] ss:$8 sm:$0xf]
    %510 = vmatprep.subr.mxu0 %v302
    %511 = vmatpush1.msra.mxu0 %v301
    %512 = vmatprep.subr.mxu0 %v298
    %513 = vmatpush1.msra.mxu0 %v297
    %514 = vmatprep.subr.mxu0 %v294
    %515 = vmatpush1.msra.mxu0 %v293
    %516 = vmatprep.subr.mxu0 %v290
    %517 = vmatpush1.msra.mxu0 %v289
    %518 = vmatprep.subr.mxu0 %v286
    %519 = vmatpush1.msra.mxu0 %v285
    %520 = vmatprep.subr.mxu0 %v282
    %521 = vmatpush1.msra.mxu0 %v281
    %522 = vmatprep.subr.mxu0 %v278
    %523 = vmatpush1.msra.mxu0 %v277
    %524 = vmatprep.subr.mxu0 %v274
    %525 = vmatpush1.msra.mxu0 %v273
    %526 = vmatprep.subr.mxu0 %v270
    %527 = vmatpush1.msra.mxu0 %v269
    %528 = vmatprep.subr.mxu0 %v266
    %529 = vmatpush1.msra.mxu0 %v265
    %530 = vmatprep.subr.mxu0 %v262
    %531 = vmatpush1.msra.mxu0 %v261
    %532 = vmatprep.subr.mxu0 %v258
    %533 = vmatpush1.msra.mxu0 %v257
    %534 = vmatprep.subr.mxu0 %v254
    %535 = vmatpush1.msra.mxu0 %v253
    %536 = vmatprep.subr.mxu0 %v250
    %537 = vmatpush1.msra.mxu0 %v249
    %538 = vmatprep.subr.mxu0 %v246
    %539 = vmatpush1.msra.mxu0 %v245
    %540 = vmatprep.subr.mxu0 %v242
    %541 = vmatpush1.msra.mxu0 %v241
    %542 = vmatprep.subr.mxu0 0.0
    %543 = vmatpush2.msra.mxu0 0.0
    %544 = vmatprep.subr.mxu0 0.0
    %545 = vmatpush2.msra.mxu0 0.0
    %546 = vmatprep.subr.mxu0 0.0
    %547 = vmatpush2.msra.mxu0 0.0
    %548 = vmatprep.subr.mxu0 0.0
    %549 = vmatpush2.msra.mxu0 0.0
    %550 = vmatprep.subr.mxu0 0.0
    %551 = vmatpush2.msra.mxu0 0.0
    %552 = vmatprep.subr.mxu0 0.0
    %553 = vmatpush2.msra.mxu0 0.0
    %554 = vmatprep.subr.mxu0 0.0
    %555 = vmatpush2.msra.mxu0 0.0
    %556 = vmatprep.subr.mxu0 0.0
    %557 = vmatpush2.msra.mxu0 0.0
    %558 = vmatprep.subr.mxu0 0.0
    %559 = vmatpush2.msra.mxu0 0.0
    %560 = vmatprep.subr.mxu0 0.0
    %561 = vmatpush2.msra.mxu0 0.0
    %562 = vmatprep.subr.mxu0 0.0
    %563 = vmatpush2.msra.mxu0 0.0
    %564 = vmatprep.subr.mxu0 0.0
    %565 = vmatpush2.msra.mxu0 0.0
    %566 = vmatprep.subr.mxu0 0.0
    %567 = vmatpush2.msra.mxu0 0.0
    %568 = vmatprep.subr.mxu0 0.0
    %569 = vmatpush2.msra.mxu0 0.0
    %570 = vmatprep.subr.mxu0 0.0
    %571 = vmatpush2.msra.mxu0 0.0
    %572 = vmatprep.subr.mxu0 0.0
    %573 = vmatpush2.msra.mxu0 0.0
    %574 = vmatprep.mubr.f32.mxu0 0.0
    %575 = vmatmul.mubr.f32.gmra.mxu0 %v507
    %v576 = vpop.f32.mrf.mxu0
    %v577 = vadd.f32 0.0, %v576
    %v578 = vpop.f32.mrf.mxu0
    %v579 = vadd.f32 0.0, %v578
    %580 = vdwg.mxu0
    %581 = vmatprep.subr.mxu0 %v304
    %582 = vmatpush1.msra.mxu0 %v303
    %583 = vmatprep.subr.mxu0 %v300
    %584 = vmatpush1.msra.mxu0 %v299
    %585 = vmatprep.subr.mxu0 %v296
    %586 = vmatpush1.msra.mxu0 %v295
    %587 = vmatprep.subr.mxu0 %v292
    %588 = vmatpush1.msra.mxu0 %v291
    %589 = vmatprep.subr.mxu0 %v288
    %590 = vmatpush1.msra.mxu0 %v287
    %591 = vmatprep.subr.mxu0 %v284
    %592 = vmatpush1.msra.mxu0 %v283
    %593 = vmatprep.subr.mxu0 %v280
    %594 = vmatpush1.msra.mxu0 %v279
    %595 = vmatprep.subr.mxu0 %v276
    %596 = vmatpush1.msra.mxu0 %v275
    %597 = vmatprep.subr.mxu0 %v272
    %598 = vmatpush1.msra.mxu0 %v271
    %599 = vmatprep.subr.mxu0 %v268
    %600 = vmatpush1.msra.mxu0 %v267
    %601 = vmatprep.subr.mxu0 %v264
    %602 = vmatpush1.msra.mxu0 %v263
    %603 = vmatprep.subr.mxu0 %v260
    %604 = vmatpush1.msra.mxu0 %v259
    %605 = vmatprep.subr.mxu0 %v256
    %606 = vmatpush1.msra.mxu0 %v255
    %607 = vmatprep.subr.mxu0 %v252
    %608 = vmatpush1.msra.mxu0 %v251
    %609 = vmatprep.subr.mxu0 %v248
    %610 = vmatpush1.msra.mxu0 %v247
    %611 = vmatprep.subr.mxu0 %v244
    %612 = vmatpush1.msra.mxu0 %v243
    %613 = vmatprep.subr.mxu0 0.0
    %614 = vmatpush2.msra.mxu0 0.0
    %615 = vmatprep.subr.mxu0 0.0
    %616 = vmatpush2.msra.mxu0 0.0
    %617 = vmatprep.subr.mxu0 0.0
    %618 = vmatpush2.msra.mxu0 0.0
    %619 = vmatprep.subr.mxu0 0.0
    %620 = vmatpush2.msra.mxu0 0.0
    %621 = vmatprep.subr.mxu0 0.0
    %622 = vmatpush2.msra.mxu0 0.0
    %623 = vmatprep.subr.mxu0 0.0
    %624 = vmatpush2.msra.mxu0 0.0
    %625 = vmatprep.subr.mxu0 0.0
    %626 = vmatpush2.msra.mxu0 0.0
    %627 = vmatprep.subr.mxu0 0.0
    %628 = vmatpush2.msra.mxu0 0.0
    %629 = vmatprep.subr.mxu0 0.0
    %630 = vmatpush2.msra.mxu0 0.0
    %631 = vmatprep.subr.mxu0 0.0
    %632 = vmatpush2.msra.mxu0 0.0
    %633 = vmatprep.subr.mxu0 0.0
    %634 = vmatpush2.msra.mxu0 0.0
    %635 = vmatprep.subr.mxu0 0.0
    %636 = vmatpush2.msra.mxu0 0.0
    %637 = vmatprep.subr.mxu0 0.0
    %638 = vmatpush2.msra.mxu0 0.0
    %639 = vmatprep.subr.mxu0 0.0
    %640 = vmatpush2.msra.mxu0 0.0
    %641 = vmatprep.subr.mxu0 0.0
    %642 = vmatpush2.msra.mxu0 0.0
    %643 = vmatprep.subr.mxu0 0.0
    %644 = vmatpush2.msra.mxu0 0.0
    %645 = vmatprep.mubr.f32.mxu0 0.0
    %646 = vmatmul.mubr.f32.gmra.mxu0 %v507
    %v647 = vpop.f32.mrf.mxu0
    %v648 = vadd.f32 0.0, %v647
    %v649 = vpop.f32.mrf.mxu0
    %v650 = vadd.f32 0.0, %v649
    %651 = vdwg.mxu0
    %v656 = vcombine.low %v577, %v579
    %v657 = vcombine.low %v648, %v650
    %v659 = vunpack.c.l.s4 1966171168
    %v660 = vunpack.c.0.s8 %v659
    %v661 = vlaneseq
    %v662 = vshrl.u32 %v661, 7
    %v663 = vsub.s32 %v660, %v662
    %v664 = vrot.slane %v656, %v663
    %v666 = vunpack.c.l.s4 1966171168
    %v667 = vunpack.c.0.s8 %v666
    %v668 = vlaneseq
    %v669 = vshrl.u32 %v668, 7
    %v670 = vsub.s32 %v667, %v669
    %v671 = vrot.slane %v657, %v670
    %v672 = vcombine.low %v664, %v671
    %v674 = vunpack.c.l.s4 1966171168
    %v675 = vunpack.c.0.s8 %v674
    %v676 = vlaneseq
    %v677 = vshrl.u32 %v676, 7
    %v678 = vsub.s32 %v675, %v677
    %v679 = vrot.slane %v672, %v678
    %v681 = vadd.f32 %v509, %v679
    %v682 = vxor.u32 %v681, 2147483648
    %v683 = vmul.f32 %v682, 1.442695
    %v684 = vpow.pop %v683
    %v685 = vadd.f32 %v684, 1.0
    %v686 = vrcp.pop %v685
    %v687 = vmul.f32 1.0, %v686
    %v689 = vrot.slane %v681, 1
    %v691 = vxor.u32 %v689, 2147483648
    %v692 = vmul.f32 %v691, 1.442695
    %v693 = vpow.pop %v692
    %v694 = vadd.f32 %v693, 1.0
    %v695 = vrcp.pop %v694
    %v696 = vmul.f32 1.0, %v695
    %v697 = vrot.slane %v681, 2
    %v699 = vtanh.pop %v697
    %v700 = vrot.slane %v681, 3
    %v702 = vxor.u32 %v700, 2147483648
    %v703 = vmul.f32 %v702, 1.442695
    %v704 = vpow.pop %v703
    %v705 = vadd.f32 %v704, 1.0
    %v706 = vrcp.pop %v705
    %v707 = vmul.f32 1.0, %v706
    %v708 = vmul.f32 %v696, %v505
    %v709 = vmul.f32 %v687, %v699
    %v710 = vadd.f32 %v708, %v709
    %v711 = vtanh.pop %v710
    %v712 = vmul.f32 %v707, %v711
    %s713 = scalar_lea.vmem [#allocation2], 2
    %v714 = vld [vmem:[%s713] ss:$8 sm:$0xf]
    %715 = vmatprep.subr.mxu0 %v302
    %716 = vmatpush1.msra.mxu0 %v301
    %717 = vmatprep.subr.mxu0 %v298
    %718 = vmatpush1.msra.mxu0 %v297
    %719 = vmatprep.subr.mxu0 %v294
    %720 = vmatpush1.msra.mxu0 %v293
    %721 = vmatprep.subr.mxu0 %v290
    %722 = vmatpush1.msra.mxu0 %v289
    %723 = vmatprep.subr.mxu0 %v286
    %724 = vmatpush1.msra.mxu0 %v285
    %725 = vmatprep.subr.mxu0 %v282
    %726 = vmatpush1.msra.mxu0 %v281
    %727 = vmatprep.subr.mxu0 %v278
    %728 = vmatpush1.msra.mxu0 %v277
    %729 = vmatprep.subr.mxu0 %v274
    %730 = vmatpush1.msra.mxu0 %v273
    %731 = vmatprep.subr.mxu0 %v270
    %732 = vmatpush1.msra.mxu0 %v269
    %733 = vmatprep.subr.mxu0 %v266
    %734 = vmatpush1.msra.mxu0 %v265
    %735 = vmatprep.subr.mxu0 %v262
    %736 = vmatpush1.msra.mxu0 %v261
    %737 = vmatprep.subr.mxu0 %v258
    %738 = vmatpush1.msra.mxu0 %v257
    %739 = vmatprep.subr.mxu0 %v254
    %740 = vmatpush1.msra.mxu0 %v253
    %741 = vmatprep.subr.mxu0 %v250
    %742 = vmatpush1.msra.mxu0 %v249
    %743 = vmatprep.subr.mxu0 %v246
    %744 = vmatpush1.msra.mxu0 %v245
    %745 = vmatprep.subr.mxu0 %v242
    %746 = vmatpush1.msra.mxu0 %v241
    %747 = vmatprep.subr.mxu0 0.0
    %748 = vmatpush2.msra.mxu0 0.0
    %749 = vmatprep.subr.mxu0 0.0
    %750 = vmatpush2.msra.mxu0 0.0
    %751 = vmatprep.subr.mxu0 0.0
    %752 = vmatpush2.msra.mxu0 0.0
    %753 = vmatprep.subr.mxu0 0.0
    %754 = vmatpush2.msra.mxu0 0.0
    %755 = vmatprep.subr.mxu0 0.0
    %756 = vmatpush2.msra.mxu0 0.0
    %757 = vmatprep.subr.mxu0 0.0
    %758 = vmatpush2.msra.mxu0 0.0
    %759 = vmatprep.subr.mxu0 0.0
    %760 = vmatpush2.msra.mxu0 0.0
    %761 = vmatprep.subr.mxu0 0.0
    %762 = vmatpush2.msra.mxu0 0.0
    %763 = vmatprep.subr.mxu0 0.0
    %764 = vmatpush2.msra.mxu0 0.0
    %765 = vmatprep.subr.mxu0 0.0
    %766 = vmatpush2.msra.mxu0 0.0
    %767 = vmatprep.subr.mxu0 0.0
    %768 = vmatpush2.msra.mxu0 0.0
    %769 = vmatprep.subr.mxu0 0.0
    %770 = vmatpush2.msra.mxu0 0.0
    %771 = vmatprep.subr.mxu0 0.0
    %772 = vmatpush2.msra.mxu0 0.0
    %773 = vmatprep.subr.mxu0 0.0
    %774 = vmatpush2.msra.mxu0 0.0
    %775 = vmatprep.subr.mxu0 0.0
    %776 = vmatpush2.msra.mxu0 0.0
    %777 = vmatprep.subr.mxu0 0.0
    %778 = vmatpush2.msra.mxu0 0.0
    %779 = vmatprep.mubr.f32.mxu0 0.0
    %780 = vmatmul.mubr.f32.gmra.mxu0 %v712
    %v781 = vpop.f32.mrf.mxu0
    %v782 = vadd.f32 0.0, %v781
    %v783 = vpop.f32.mrf.mxu0
    %v784 = vadd.f32 0.0, %v783
    %785 = vdwg.mxu0
    %786 = vmatprep.subr.mxu0 %v304
    %787 = vmatpush1.msra.mxu0 %v303
    %788 = vmatprep.subr.mxu0 %v300
    %789 = vmatpush1.msra.mxu0 %v299
    %790 = vmatprep.subr.mxu0 %v296
    %791 = vmatpush1.msra.mxu0 %v295
    %792 = vmatprep.subr.mxu0 %v292
    %793 = vmatpush1.msra.mxu0 %v291
    %794 = vmatprep.subr.mxu0 %v288
    %795 = vmatpush1.msra.mxu0 %v287
    %796 = vmatprep.subr.mxu0 %v284
    %797 = vmatpush1.msra.mxu0 %v283
    %798 = vmatprep.subr.mxu0 %v280
    %799 = vmatpush1.msra.mxu0 %v279
    %800 = vmatprep.subr.mxu0 %v276
    %801 = vmatpush1.msra.mxu0 %v275
    %802 = vmatprep.subr.mxu0 %v272
    %803 = vmatpush1.msra.mxu0 %v271
    %804 = vmatprep.subr.mxu0 %v268
    %805 = vmatpush1.msra.mxu0 %v267
    %806 = vmatprep.subr.mxu0 %v264
    %807 = vmatpush1.msra.mxu0 %v263
    %808 = vmatprep.subr.mxu0 %v260
    %809 = vmatpush1.msra.mxu0 %v259
    %810 = vmatprep.subr.mxu0 %v256
    %811 = vmatpush1.msra.mxu0 %v255
    %812 = vmatprep.subr.mxu0 %v252
    %813 = vmatpush1.msra.mxu0 %v251
    %814 = vmatprep.subr.mxu0 %v248
    %815 = vmatpush1.msra.mxu0 %v247
    %816 = vmatprep.subr.mxu0 %v244
    %817 = vmatpush1.msra.mxu0 %v243
    %818 = vmatprep.subr.mxu0 0.0
    %819 = vmatpush2.msra.mxu0 0.0
    %820 = vmatprep.subr.mxu0 0.0
    %821 = vmatpush2.msra.mxu0 0.0
    %822 = vmatprep.subr.mxu0 0.0
    %823 = vmatpush2.msra.mxu0 0.0
    %824 = vmatprep.subr.mxu0 0.0
    %825 = vmatpush2.msra.mxu0 0.0
    %826 = vmatprep.subr.mxu0 0.0
    %827 = vmatpush2.msra.mxu0 0.0
    %828 = vmatprep.subr.mxu0 0.0
    %829 = vmatpush2.msra.mxu0 0.0
    %830 = vmatprep.subr.mxu0 0.0
    %831 = vmatpush2.msra.mxu0 0.0
    %832 = vmatprep.subr.mxu0 0.0
    %833 = vmatpush2.msra.mxu0 0.0
    %834 = vmatprep.subr.mxu0 0.0
    %835 = vmatpush2.msra.mxu0 0.0
    %836 = vmatprep.subr.mxu0 0.0
    %837 = vmatpush2.msra.mxu0 0.0
    %838 = vmatprep.subr.mxu0 0.0
    %839 = vmatpush2.msra.mxu0 0.0
    %840 = vmatprep.subr.mxu0 0.0
    %841 = vmatpush2.msra.mxu0 0.0
    %842 = vmatprep.subr.mxu0 0.0
    %843 = vmatpush2.msra.mxu0 0.0
    %844 = vmatprep.subr.mxu0 0.0
    %845 = vmatpush2.msra.mxu0 0.0
    %846 = vmatprep.subr.mxu0 0.0
    %847 = vmatpush2.msra.mxu0 0.0
    %848 = vmatprep.subr.mxu0 0.0
    %849 = vmatpush2.msra.mxu0 0.0
    %850 = vmatprep.mubr.f32.mxu0 0.0
    %851 = vmatmul.mubr.f32.gmra.mxu0 %v712
    %v852 = vpop.f32.mrf.mxu0
    %v853 = vadd.f32 0.0, %v852
    %v854 = vpop.f32.mrf.mxu0
    %v855 = vadd.f32 0.0, %v854
    %856 = vdwg.mxu0
    %v861 = vcombine.low %v782, %v784
    %v862 = vcombine.low %v853, %v855
    %v864 = vunpack.c.l.s4 1966171168
    %v865 = vunpack.c.0.s8 %v864
    %v866 = vlaneseq
    %v867 = vshrl.u32 %v866, 7
    %v868 = vsub.s32 %v865, %v867
    %v869 = vrot.slane %v861, %v868
    %v871 = vunpack.c.l.s4 1966171168
    %v872 = vunpack.c.0.s8 %v871
    %v873 = vlaneseq
    %v874 = vshrl.u32 %v873, 7
    %v875 = vsub.s32 %v872, %v874
    %v876 = vrot.slane %v862, %v875
    %v877 = vcombine.low %v869, %v876
    %v879 = vunpack.c.l.s4 1966171168
    %v880 = vunpack.c.0.s8 %v879
    %v881 = vlaneseq
    %v882 = vshrl.u32 %v881, 7
    %v883 = vsub.s32 %v880, %v882
    %v884 = vrot.slane %v877, %v883
    %v886 = vadd.f32 %v714, %v884
    %v887 = vxor.u32 %v886, 2147483648
    %v888 = vmul.f32 %v887, 1.442695
    %v889 = vpow.pop %v888
    %v890 = vadd.f32 %v889, 1.0
    %v891 = vrcp.pop %v890
    %v892 = vmul.f32 1.0, %v891
    %v894 = vrot.slane %v886, 1
    %v896 = vxor.u32 %v894, 2147483648
    %v897 = vmul.f32 %v896, 1.442695
    %v898 = vpow.pop %v897
    %v899 = vadd.f32 %v898, 1.0
    %v900 = vrcp.pop %v899
    %v901 = vmul.f32 1.0, %v900
    %v902 = vrot.slane %v886, 2
    %v904 = vtanh.pop %v902
    %v905 = vrot.slane %v886, 3
    %v907 = vxor.u32 %v905, 2147483648
    %v908 = vmul.f32 %v907, 1.442695
    %v909 = vpow.pop %v908
    %v910 = vadd.f32 %v909, 1.0
    %v911 = vrcp.pop %v910
    %v912 = vmul.f32 1.0, %v911
    %v913 = vmul.f32 %v901, %v710
    %v914 = vmul.f32 %v892, %v904
    %v915 = vadd.f32 %v913, %v914
    %v916 = vtanh.pop %v915
    %v917 = vmul.f32 %v912, %v916
    %s918 = scalar_lea.vmem [#allocation2], 3
    %v919 = vld [vmem:[%s918] ss:$8 sm:$0xf]
    %920 = vmatprep.subr.mxu0 %v302
    %921 = vmatpush1.msra.mxu0 %v301
    %922 = vmatprep.subr.mxu0 %v298
    %923 = vmatpush1.msra.mxu0 %v297
    %924 = vmatprep.subr.mxu0 %v294
    %925 = vmatpush1.msra.mxu0 %v293
    %926 = vmatprep.subr.mxu0 %v290
    %927 = vmatpush1.msra.mxu0 %v289
    %928 = vmatprep.subr.mxu0 %v286
    %929 = vmatpush1.msra.mxu0 %v285
    %930 = vmatprep.subr.mxu0 %v282
    %931 = vmatpush1.msra.mxu0 %v281
    %932 = vmatprep.subr.mxu0 %v278
    %933 = vmatpush1.msra.mxu0 %v277
    %934 = vmatprep.subr.mxu0 %v274
    %935 = vmatpush1.msra.mxu0 %v273
    %936 = vmatprep.subr.mxu0 %v270
    %937 = vmatpush1.msra.mxu0 %v269
    %938 = vmatprep.subr.mxu0 %v266
    %939 = vmatpush1.msra.mxu0 %v265
    %940 = vmatprep.subr.mxu0 %v262
    %941 = vmatpush1.msra.mxu0 %v261
    %942 = vmatprep.subr.mxu0 %v258
    %943 = vmatpush1.msra.mxu0 %v257
    %944 = vmatprep.subr.mxu0 %v254
    %945 = vmatpush1.msra.mxu0 %v253
    %946 = vmatprep.subr.mxu0 %v250
    %947 = vmatpush1.msra.mxu0 %v249
    %948 = vmatprep.subr.mxu0 %v246
    %949 = vmatpush1.msra.mxu0 %v245
    %950 = vmatprep.subr.mxu0 %v242
    %951 = vmatpush1.msra.mxu0 %v241
    %952 = vmatprep.subr.mxu0 0.0
    %953 = vmatpush2.msra.mxu0 0.0
    %954 = vmatprep.subr.mxu0 0.0
    %955 = vmatpush2.msra.mxu0 0.0
    %956 = vmatprep.subr.mxu0 0.0
    %957 = vmatpush2.msra.mxu0 0.0
    %958 = vmatprep.subr.mxu0 0.0
    %959 = vmatpush2.msra.mxu0 0.0
    %960 = vmatprep.subr.mxu0 0.0
    %961 = vmatpush2.msra.mxu0 0.0
    %962 = vmatprep.subr.mxu0 0.0
    %963 = vmatpush2.msra.mxu0 0.0
    %964 = vmatprep.subr.mxu0 0.0
    %965 = vmatpush2.msra.mxu0 0.0
    %966 = vmatprep.subr.mxu0 0.0
    %967 = vmatpush2.msra.mxu0 0.0
    %968 = vmatprep.subr.mxu0 0.0
    %969 = vmatpush2.msra.mxu0 0.0
    %970 = vmatprep.subr.mxu0 0.0
    %971 = vmatpush2.msra.mxu0 0.0
    %972 = vmatprep.subr.mxu0 0.0
    %973 = vmatpush2.msra.mxu0 0.0
    %974 = vmatprep.subr.mxu0 0.0
    %975 = vmatpush2.msra.mxu0 0.0
    %976 = vmatprep.subr.mxu0 0.0
    %977 = vmatpush2.msra.mxu0 0.0
    %978 = vmatprep.subr.mxu0 0.0
    %979 = vmatpush2.msra.mxu0 0.0
    %980 = vmatprep.subr.mxu0 0.0
    %981 = vmatpush2.msra.mxu0 0.0
    %982 = vmatprep.subr.mxu0 0.0
    %983 = vmatpush2.msra.mxu0 0.0
    %984 = vmatprep.mubr.f32.mxu0 0.0
    %985 = vmatmul.mubr.f32.gmra.mxu0 %v917
    %v986 = vpop.f32.mrf.mxu0
    %v987 = vadd.f32 0.0, %v986
    %v988 = vpop.f32.mrf.mxu0
    %v989 = vadd.f32 0.0, %v988
    %990 = vdwg.mxu0
    %991 = vmatprep.subr.mxu0 %v304
    %992 = vmatpush1.msra.mxu0 %v303
    %993 = vmatprep.subr.mxu0 %v300
    %994 = vmatpush1.msra.mxu0 %v299
    %995 = vmatprep.subr.mxu0 %v296
    %996 = vmatpush1.msra.mxu0 %v295
    %997 = vmatprep.subr.mxu0 %v292
    %998 = vmatpush1.msra.mxu0 %v291
    %999 = vmatprep.subr.mxu0 %v288
    %1000 = vmatpush1.msra.mxu0 %v287
    %1001 = vmatprep.subr.mxu0 %v284
    %1002 = vmatpush1.msra.mxu0 %v283
    %1003 = vmatprep.subr.mxu0 %v280
    %1004 = vmatpush1.msra.mxu0 %v279
    %1005 = vmatprep.subr.mxu0 %v276
    %1006 = vmatpush1.msra.mxu0 %v275
    %1007 = vmatprep.subr.mxu0 %v272
    %1008 = vmatpush1.msra.mxu0 %v271
    %1009 = vmatprep.subr.mxu0 %v268
    %1010 = vmatpush1.msra.mxu0 %v267
    %1011 = vmatprep.subr.mxu0 %v264
    %1012 = vmatpush1.msra.mxu0 %v263
    %1013 = vmatprep.subr.mxu0 %v260
    %1014 = vmatpush1.msra.mxu0 %v259
    %1015 = vmatprep.subr.mxu0 %v256
    %1016 = vmatpush1.msra.mxu0 %v255
    %1017 = vmatprep.subr.mxu0 %v252
    %1018 = vmatpush1.msra.mxu0 %v251
    %1019 = vmatprep.subr.mxu0 %v248
    %1020 = vmatpush1.msra.mxu0 %v247
    %1021 = vmatprep.subr.mxu0 %v244
    %1022 = vmatpush1.msra.mxu0 %v243
    %1023 = vmatprep.subr.mxu0 0.0
    %1024 = vmatpush2.msra.mxu0 0.0
    %1025 = vmatprep.subr.mxu0 0.0
    %1026 = vmatpush2.msra.mxu0 0.0
    %1027 = vmatprep.subr.mxu0 0.0
    %1028 = vmatpush2.msra.mxu0 0.0
    %1029 = vmatprep.subr.mxu0 0.0
    %1030 = vmatpush2.msra.mxu0 0.0
    %1031 = vmatprep.subr.mxu0 0.0
    %1032 = vmatpush2.msra.mxu0 0.0
    %1033 = vmatprep.subr.mxu0 0.0
    %1034 = vmatpush2.msra.mxu0 0.0
    %1035 = vmatprep.subr.mxu0 0.0
    %1036 = vmatpush2.msra.mxu0 0.0
    %1037 = vmatprep.subr.mxu0 0.0
    %1038 = vmatpush2.msra.mxu0 0.0
    %1039 = vmatprep.subr.mxu0 0.0
    %1040 = vmatpush2.msra.mxu0 0.0
    %1041 = vmatprep.subr.mxu0 0.0
    %1042 = vmatpush2.msra.mxu0 0.0
    %1043 = vmatprep.subr.mxu0 0.0
    %1044 = vmatpush2.msra.mxu0 0.0
    %1045 = vmatprep.subr.mxu0 0.0
    %1046 = vmatpush2.msra.mxu0 0.0
    %1047 = vmatprep.subr.mxu0 0.0
    %1048 = vmatpush2.msra.mxu0 0.0
    %1049 = vmatprep.subr.mxu0 0.0
    %1050 = vmatpush2.msra.mxu0 0.0
    %1051 = vmatprep.subr.mxu0 0.0
    %1052 = vmatpush2.msra.mxu0 0.0
    %1053 = vmatprep.subr.mxu0 0.0
    %1054 = vmatpush2.msra.mxu0 0.0
    %1055 = vmatprep.mubr.f32.mxu0 0.0
    %1056 = vmatmul.mubr.f32.gmra.mxu0 %v917
    %v1057 = vpop.f32.mrf.mxu0
    %v1058 = vadd.f32 0.0, %v1057
    %v1059 = vpop.f32.mrf.mxu0
    %v1060 = vadd.f32 0.0, %v1059
    %1061 = vdwg.mxu0
    %v1066 = vcombine.low %v987, %v989
    %v1067 = vcombine.low %v1058, %v1060
    %v1069 = vunpack.c.l.s4 1966171168
    %v1070 = vunpack.c.0.s8 %v1069
    %v1071 = vlaneseq
    %v1072 = vshrl.u32 %v1071, 7
    %v1073 = vsub.s32 %v1070, %v1072
    %v1074 = vrot.slane %v1066, %v1073
    %v1076 = vunpack.c.l.s4 1966171168
    %v1077 = vunpack.c.0.s8 %v1076
    %v1078 = vlaneseq
    %v1079 = vshrl.u32 %v1078, 7
    %v1080 = vsub.s32 %v1077, %v1079
    %v1081 = vrot.slane %v1067, %v1080
    %v1082 = vcombine.low %v1074, %v1081
    %v1084 = vunpack.c.l.s4 1966171168
    %v1085 = vunpack.c.0.s8 %v1084
    %v1086 = vlaneseq
    %v1087 = vshrl.u32 %v1086, 7
    %v1088 = vsub.s32 %v1085, %v1087
    %v1089 = vrot.slane %v1082, %v1088
    %v1091 = vadd.f32 %v919, %v1089
    %v1092 = vxor.u32 %v1091, 2147483648
    %v1093 = vmul.f32 %v1092, 1.442695
    %v1094 = vpow.pop %v1093
    %v1095 = vadd.f32 %v1094, 1.0
    %v1096 = vrcp.pop %v1095
    %v1097 = vmul.f32 1.0, %v1096
    %v1099 = vrot.slane %v1091, 1
    %v1101 = vxor.u32 %v1099, 2147483648
    %v1102 = vmul.f32 %v1101, 1.442695
    %v1103 = vpow.pop %v1102
    %v1104 = vadd.f32 %v1103, 1.0
    %v1105 = vrcp.pop %v1104
    %v1106 = vmul.f32 1.0, %v1105
    %v1107 = vrot.slane %v1091, 2
    %v1109 = vtanh.pop %v1107
    %v1110 = vrot.slane %v1091, 3
    %v1112 = vxor.u32 %v1110, 2147483648
    %v1113 = vmul.f32 %v1112, 1.442695
    %v1114 = vpow.pop %v1113
    %v1115 = vadd.f32 %v1114, 1.0
    %v1116 = vrcp.pop %v1115
    %v1117 = vmul.f32 1.0, %v1116
    %v1118 = vmul.f32 %v1106, %v915
    %v1119 = vmul.f32 %v1097, %v1109
    %v1120 = vadd.f32 %v1118, %v1119
    %v1121 = vtanh.pop %v1120
    %v1122 = vmul.f32 %v1117, %v1121
    %s1123 = scalar_lea.vmem [#allocation2], 4
    %v1124 = vld [vmem:[%s1123] ss:$8 sm:$0xf]
    %1125 = vmatprep.subr.mxu0 %v302
    %1126 = vmatpush1.msra.mxu0 %v301
    %1127 = vmatprep.subr.mxu0 %v298
    %1128 = vmatpush1.msra.mxu0 %v297
    %1129 = vmatprep.subr.mxu0 %v294
    %1130 = vmatpush1.msra.mxu0 %v293
    %1131 = vmatprep.subr.mxu0 %v290
    %1132 = vmatpush1.msra.mxu0 %v289
    %1133 = vmatprep.subr.mxu0 %v286
    %1134 = vmatpush1.msra.mxu0 %v285
    %1135 = vmatprep.subr.mxu0 %v282
    %1136 = vmatpush1.msra.mxu0 %v281
    %1137 = vmatprep.subr.mxu0 %v278
    %1138 = vmatpush1.msra.mxu0 %v277
    %1139 = vmatprep.subr.mxu0 %v274
    %1140 = vmatpush1.msra.mxu0 %v273
    %1141 = vmatprep.subr.mxu0 %v270
    %1142 = vmatpush1.msra.mxu0 %v269
    %1143 = vmatprep.subr.mxu0 %v266
    %1144 = vmatpush1.msra.mxu0 %v265
    %1145 = vmatprep.subr.mxu0 %v262
    %1146 = vmatpush1.msra.mxu0 %v261
    %1147 = vmatprep.subr.mxu0 %v258
    %1148 = vmatpush1.msra.mxu0 %v257
    %1149 = vmatprep.subr.mxu0 %v254
    %1150 = vmatpush1.msra.mxu0 %v253
    %1151 = vmatprep.subr.mxu0 %v250
    %1152 = vmatpush1.msra.mxu0 %v249
    %1153 = vmatprep.subr.mxu0 %v246
    %1154 = vmatpush1.msra.mxu0 %v245
    %1155 = vmatprep.subr.mxu0 %v242
    %1156 = vmatpush1.msra.mxu0 %v241
    %1157 = vmatprep.subr.mxu0 0.0
    %1158 = vmatpush2.msra.mxu0 0.0
    %1159 = vmatprep.subr.mxu0 0.0
    %1160 = vmatpush2.msra.mxu0 0.0
    %1161 = vmatprep.subr.mxu0 0.0
    %1162 = vmatpush2.msra.mxu0 0.0
    %1163 = vmatprep.subr.mxu0 0.0
    %1164 = vmatpush2.msra.mxu0 0.0
    %1165 = vmatprep.subr.mxu0 0.0
    %1166 = vmatpush2.msra.mxu0 0.0
    %1167 = vmatprep.subr.mxu0 0.0
    %1168 = vmatpush2.msra.mxu0 0.0
    %1169 = vmatprep.subr.mxu0 0.0
    %1170 = vmatpush2.msra.mxu0 0.0
    %1171 = vmatprep.subr.mxu0 0.0
    %1172 = vmatpush2.msra.mxu0 0.0
    %1173 = vmatprep.subr.mxu0 0.0
    %1174 = vmatpush2.msra.mxu0 0.0
    %1175 = vmatprep.subr.mxu0 0.0
    %1176 = vmatpush2.msra.mxu0 0.0
    %1177 = vmatprep.subr.mxu0 0.0
    %1178 = vmatpush2.msra.mxu0 0.0
    %1179 = vmatprep.subr.mxu0 0.0
    %1180 = vmatpush2.msra.mxu0 0.0
    %1181 = vmatprep.subr.mxu0 0.0
    %1182 = vmatpush2.msra.mxu0 0.0
    %1183 = vmatprep.subr.mxu0 0.0
    %1184 = vmatpush2.msra.mxu0 0.0
    %1185 = vmatprep.subr.mxu0 0.0
    %1186 = vmatpush2.msra.mxu0 0.0
    %1187 = vmatprep.subr.mxu0 0.0
    %1188 = vmatpush2.msra.mxu0 0.0
    %1189 = vmatprep.mubr.f32.mxu0 0.0
    %1190 = vmatmul.mubr.f32.gmra.mxu0 %v1122
    %v1191 = vpop.f32.mrf.mxu0
    %v1192 = vadd.f32 0.0, %v1191
    %v1193 = vpop.f32.mrf.mxu0
    %v1194 = vadd.f32 0.0, %v1193
    %1195 = vdwg.mxu0
    %1196 = vmatprep.subr.mxu0 %v304
    %1197 = vmatpush1.msra.mxu0 %v303
    %1198 = vmatprep.subr.mxu0 %v300
    %1199 = vmatpush1.msra.mxu0 %v299
    %1200 = vmatprep.subr.mxu0 %v296
    %1201 = vmatpush1.msra.mxu0 %v295
    %1202 = vmatprep.subr.mxu0 %v292
    %1203 = vmatpush1.msra.mxu0 %v291
    %1204 = vmatprep.subr.mxu0 %v288
    %1205 = vmatpush1.msra.mxu0 %v287
    %1206 = vmatprep.subr.mxu0 %v284
    %1207 = vmatpush1.msra.mxu0 %v283
    %1208 = vmatprep.subr.mxu0 %v280
    %1209 = vmatpush1.msra.mxu0 %v279
    %1210 = vmatprep.subr.mxu0 %v276
    %1211 = vmatpush1.msra.mxu0 %v275
    %1212 = vmatprep.subr.mxu0 %v272
    %1213 = vmatpush1.msra.mxu0 %v271
    %1214 = vmatprep.subr.mxu0 %v268
    %1215 = vmatpush1.msra.mxu0 %v267
    %1216 = vmatprep.subr.mxu0 %v264
    %1217 = vmatpush1.msra.mxu0 %v263
    %1218 = vmatprep.subr.mxu0 %v260
    %1219 = vmatpush1.msra.mxu0 %v259
    %1220 = vmatprep.subr.mxu0 %v256
    %1221 = vmatpush1.msra.mxu0 %v255
    %1222 = vmatprep.subr.mxu0 %v252
    %1223 = vmatpush1.msra.mxu0 %v251
    %1224 = vmatprep.subr.mxu0 %v248
    %1225 = vmatpush1.msra.mxu0 %v247
    %1226 = vmatprep.subr.mxu0 %v244
    %1227 = vmatpush1.msra.mxu0 %v243
    %1228 = vmatprep.subr.mxu0 0.0
    %1229 = vmatpush2.msra.mxu0 0.0
    %1230 = vmatprep.subr.mxu0 0.0
    %1231 = vmatpush2.msra.mxu0 0.0
    %1232 = vmatprep.subr.mxu0 0.0
    %1233 = vmatpush2.msra.mxu0 0.0
    %1234 = vmatprep.subr.mxu0 0.0
    %1235 = vmatpush2.msra.mxu0 0.0
    %1236 = vmatprep.subr.mxu0 0.0
    %1237 = vmatpush2.msra.mxu0 0.0
    %1238 = vmatprep.subr.mxu0 0.0
    %1239 = vmatpush2.msra.mxu0 0.0
    %1240 = vmatprep.subr.mxu0 0.0
    %1241 = vmatpush2.msra.mxu0 0.0
    %1242 = vmatprep.subr.mxu0 0.0
    %1243 = vmatpush2.msra.mxu0 0.0
    %1244 = vmatprep.subr.mxu0 0.0
    %1245 = vmatpush2.msra.mxu0 0.0
    %1246 = vmatprep.subr.mxu0 0.0
    %1247 = vmatpush2.msra.mxu0 0.0
    %1248 = vmatprep.subr.mxu0 0.0
    %1249 = vmatpush2.msra.mxu0 0.0
    %1250 = vmatprep.subr.mxu0 0.0
    %1251 = vmatpush2.msra.mxu0 0.0
    %1252 = vmatprep.subr.mxu0 0.0
    %1253 = vmatpush2.msra.mxu0 0.0
    %1254 = vmatprep.subr.mxu0 0.0
    %1255 = vmatpush2.msra.mxu0 0.0
    %1256 = vmatprep.subr.mxu0 0.0
    %1257 = vmatpush2.msra.mxu0 0.0
    %1258 = vmatprep.subr.mxu0 0.0
    %1259 = vmatpush2.msra.mxu0 0.0
    %1260 = vmatprep.mubr.f32.mxu0 0.0
    %1261 = vmatmul.mubr.f32.gmra.mxu0 %v1122
    %v1262 = vpop.f32.mrf.mxu0
    %v1263 = vadd.f32 0.0, %v1262
    %v1264 = vpop.f32.mrf.mxu0
    %v1265 = vadd.f32 0.0, %v1264
    %1266 = vdwg.mxu0
    %v1271 = vcombine.low %v1192, %v1194
    %v1272 = vcombine.low %v1263, %v1265
    %v1274 = vunpack.c.l.s4 1966171168
    %v1275 = vunpack.c.0.s8 %v1274
    %v1276 = vlaneseq
    %v1277 = vshrl.u32 %v1276, 7
    %v1278 = vsub.s32 %v1275, %v1277
    %v1279 = vrot.slane %v1271, %v1278
    %v1281 = vunpack.c.l.s4 1966171168
    %v1282 = vunpack.c.0.s8 %v1281
    %v1283 = vlaneseq
    %v1284 = vshrl.u32 %v1283, 7
    %v1285 = vsub.s32 %v1282, %v1284
    %v1286 = vrot.slane %v1272, %v1285
    %v1287 = vcombine.low %v1279, %v1286
    %v1289 = vunpack.c.l.s4 1966171168
    %v1290 = vunpack.c.0.s8 %v1289
    %v1291 = vlaneseq
    %v1292 = vshrl.u32 %v1291, 7
    %v1293 = vsub.s32 %v1290, %v1292
    %v1294 = vrot.slane %v1287, %v1293
    %v1296 = vadd.f32 %v1124, %v1294
    %v1297 = vxor.u32 %v1296, 2147483648
    %v1298 = vmul.f32 %v1297, 1.442695
    %v1299 = vpow.pop %v1298
    %v1300 = vadd.f32 %v1299, 1.0
    %v1301 = vrcp.pop %v1300
    %v1302 = vmul.f32 1.0, %v1301
    %v1304 = vrot.slane %v1296, 1
    %v1306 = vxor.u32 %v1304, 2147483648
    %v1307 = vmul.f32 %v1306, 1.442695
    %v1308 = vpow.pop %v1307
    %v1309 = vadd.f32 %v1308, 1.0
    %v1310 = vrcp.pop %v1309
    %v1311 = vmul.f32 1.0, %v1310
    %v1312 = vrot.slane %v1296, 2
    %v1314 = vtanh.pop %v1312
    %v1315 = vrot.slane %v1296, 3
    %v1317 = vxor.u32 %v1315, 2147483648
    %v1318 = vmul.f32 %v1317, 1.442695
    %v1319 = vpow.pop %v1318
    %v1320 = vadd.f32 %v1319, 1.0
    %v1321 = vrcp.pop %v1320
    %v1322 = vmul.f32 1.0, %v1321
    %v1323 = vmul.f32 %v1311, %v1120
    %v1324 = vmul.f32 %v1302, %v1314
    %v1325 = vadd.f32 %v1323, %v1324
    %v1326 = vtanh.pop %v1325
    %v1327 = vmul.f32 %v1322, %v1326
    %s1328 = scalar_lea.vmem [#allocation2], 5
    %v1329 = vld [vmem:[%s1328] ss:$8 sm:$0xf]
    %1330 = vmatprep.subr.mxu0 %v302
    %1331 = vmatpush1.msra.mxu0 %v301
    %1332 = vmatprep.subr.mxu0 %v298
    %1333 = vmatpush1.msra.mxu0 %v297
    %1334 = vmatprep.subr.mxu0 %v294
    %1335 = vmatpush1.msra.mxu0 %v293
    %1336 = vmatprep.subr.mxu0 %v290
    %1337 = vmatpush1.msra.mxu0 %v289
    %1338 = vmatprep.subr.mxu0 %v286
    %1339 = vmatpush1.msra.mxu0 %v285
    %1340 = vmatprep.subr.mxu0 %v282
    %1341 = vmatpush1.msra.mxu0 %v281
    %1342 = vmatprep.subr.mxu0 %v278
    %1343 = vmatpush1.msra.mxu0 %v277
    %1344 = vmatprep.subr.mxu0 %v274
    %1345 = vmatpush1.msra.mxu0 %v273
    %1346 = vmatprep.subr.mxu0 %v270
    %1347 = vmatpush1.msra.mxu0 %v269
    %1348 = vmatprep.subr.mxu0 %v266
    %1349 = vmatpush1.msra.mxu0 %v265
    %1350 = vmatprep.subr.mxu0 %v262
    %1351 = vmatpush1.msra.mxu0 %v261
    %1352 = vmatprep.subr.mxu0 %v258
    %1353 = vmatpush1.msra.mxu0 %v257
    %1354 = vmatprep.subr.mxu0 %v254
    %1355 = vmatpush1.msra.mxu0 %v253
    %1356 = vmatprep.subr.mxu0 %v250
    %1357 = vmatpush1.msra.mxu0 %v249
    %1358 = vmatprep.subr.mxu0 %v246
    %1359 = vmatpush1.msra.mxu0 %v245
    %1360 = vmatprep.subr.mxu0 %v242
    %1361 = vmatpush1.msra.mxu0 %v241
    %1362 = vmatprep.subr.mxu0 0.0
    %1363 = vmatpush2.msra.mxu0 0.0
    %1364 = vmatprep.subr.mxu0 0.0
    %1365 = vmatpush2.msra.mxu0 0.0
    %1366 = vmatprep.subr.mxu0 0.0
    %1367 = vmatpush2.msra.mxu0 0.0
    %1368 = vmatprep.subr.mxu0 0.0
    %1369 = vmatpush2.msra.mxu0 0.0
    %1370 = vmatprep.subr.mxu0 0.0
    %1371 = vmatpush2.msra.mxu0 0.0
    %1372 = vmatprep.subr.mxu0 0.0
    %1373 = vmatpush2.msra.mxu0 0.0
    %1374 = vmatprep.subr.mxu0 0.0
    %1375 = vmatpush2.msra.mxu0 0.0
    %1376 = vmatprep.subr.mxu0 0.0
    %1377 = vmatpush2.msra.mxu0 0.0
    %1378 = vmatprep.subr.mxu0 0.0
    %1379 = vmatpush2.msra.mxu0 0.0
    %1380 = vmatprep.subr.mxu0 0.0
    %1381 = vmatpush2.msra.mxu0 0.0
    %1382 = vmatprep.subr.mxu0 0.0
    %1383 = vmatpush2.msra.mxu0 0.0
    %1384 = vmatprep.subr.mxu0 0.0
    %1385 = vmatpush2.msra.mxu0 0.0
    %1386 = vmatprep.subr.mxu0 0.0
    %1387 = vmatpush2.msra.mxu0 0.0
    %1388 = vmatprep.subr.mxu0 0.0
    %1389 = vmatpush2.msra.mxu0 0.0
    %1390 = vmatprep.subr.mxu0 0.0
    %1391 = vmatpush2.msra.mxu0 0.0
    %1392 = vmatprep.subr.mxu0 0.0
    %1393 = vmatpush2.msra.mxu0 0.0
    %1394 = vmatprep.mubr.f32.mxu0 0.0
    %1395 = vmatmul.mubr.f32.gmra.mxu0 %v1327
    %v1396 = vpop.f32.mrf.mxu0
    %v1397 = vadd.f32 0.0, %v1396
    %v1398 = vpop.f32.mrf.mxu0
    %v1399 = vadd.f32 0.0, %v1398
    %1400 = vdwg.mxu0
    %1401 = vmatprep.subr.mxu0 %v304
    %1402 = vmatpush1.msra.mxu0 %v303
    %1403 = vmatprep.subr.mxu0 %v300
    %1404 = vmatpush1.msra.mxu0 %v299
    %1405 = vmatprep.subr.mxu0 %v296
    %1406 = vmatpush1.msra.mxu0 %v295
    %1407 = vmatprep.subr.mxu0 %v292
    %1408 = vmatpush1.msra.mxu0 %v291
    %1409 = vmatprep.subr.mxu0 %v288
    %1410 = vmatpush1.msra.mxu0 %v287
    %1411 = vmatprep.subr.mxu0 %v284
    %1412 = vmatpush1.msra.mxu0 %v283
    %1413 = vmatprep.subr.mxu0 %v280
    %1414 = vmatpush1.msra.mxu0 %v279
    %1415 = vmatprep.subr.mxu0 %v276
    %1416 = vmatpush1.msra.mxu0 %v275
    %1417 = vmatprep.subr.mxu0 %v272
    %1418 = vmatpush1.msra.mxu0 %v271
    %1419 = vmatprep.subr.mxu0 %v268
    %1420 = vmatpush1.msra.mxu0 %v267
    %1421 = vmatprep.subr.mxu0 %v264
    %1422 = vmatpush1.msra.mxu0 %v263
    %1423 = vmatprep.subr.mxu0 %v260
    %1424 = vmatpush1.msra.mxu0 %v259
    %1425 = vmatprep.subr.mxu0 %v256
    %1426 = vmatpush1.msra.mxu0 %v255
    %1427 = vmatprep.subr.mxu0 %v252
    %1428 = vmatpush1.msra.mxu0 %v251
    %1429 = vmatprep.subr.mxu0 %v248
    %1430 = vmatpush1.msra.mxu0 %v247
    %1431 = vmatprep.subr.mxu0 %v244
    %1432 = vmatpush1.msra.mxu0 %v243
    %1433 = vmatprep.subr.mxu0 0.0
    %1434 = vmatpush2.msra.mxu0 0.0
    %1435 = vmatprep.subr.mxu0 0.0
    %1436 = vmatpush2.msra.mxu0 0.0
    %1437 = vmatprep.subr.mxu0 0.0
    %1438 = vmatpush2.msra.mxu0 0.0
    %1439 = vmatprep.subr.mxu0 0.0
    %1440 = vmatpush2.msra.mxu0 0.0
    %1441 = vmatprep.subr.mxu0 0.0
    %1442 = vmatpush2.msra.mxu0 0.0
    %1443 = vmatprep.subr.mxu0 0.0
    %1444 = vmatpush2.msra.mxu0 0.0
    %1445 = vmatprep.subr.mxu0 0.0
    %1446 = vmatpush2.msra.mxu0 0.0
    %1447 = vmatprep.subr.mxu0 0.0
    %1448 = vmatpush2.msra.mxu0 0.0
    %1449 = vmatprep.subr.mxu0 0.0
    %1450 = vmatpush2.msra.mxu0 0.0
    %1451 = vmatprep.subr.mxu0 0.0
    %1452 = vmatpush2.msra.mxu0 0.0
    %1453 = vmatprep.subr.mxu0 0.0
    %1454 = vmatpush2.msra.mxu0 0.0
    %1455 = vmatprep.subr.mxu0 0.0
    %1456 = vmatpush2.msra.mxu0 0.0
    %1457 = vmatprep.subr.mxu0 0.0
    %1458 = vmatpush2.msra.mxu0 0.0
    %1459 = vmatprep.subr.mxu0 0.0
    %1460 = vmatpush2.msra.mxu0 0.0
    %1461 = vmatprep.subr.mxu0 0.0
    %1462 = vmatpush2.msra.mxu0 0.0
    %1463 = vmatprep.subr.mxu0 0.0
    %1464 = vmatpush2.msra.mxu0 0.0
    %1465 = vmatprep.mubr.f32.mxu0 0.0
    %1466 = vmatmul.mubr.f32.gmra.mxu0 %v1327
    %v1467 = vpop.f32.mrf.mxu0
    %v1468 = vadd.f32 0.0, %v1467
    %v1469 = vpop.f32.mrf.mxu0
    %v1470 = vadd.f32 0.0, %v1469
    %1471 = vdwg.mxu0
    %v1476 = vcombine.low %v1397, %v1399
    %v1477 = vcombine.low %v1468, %v1470
    %v1479 = vunpack.c.l.s4 1966171168
    %v1480 = vunpack.c.0.s8 %v1479
    %v1481 = vlaneseq
    %v1482 = vshrl.u32 %v1481, 7
    %v1483 = vsub.s32 %v1480, %v1482
    %v1484 = vrot.slane %v1476, %v1483
    %v1486 = vunpack.c.l.s4 1966171168
    %v1487 = vunpack.c.0.s8 %v1486
    %v1488 = vlaneseq
    %v1489 = vshrl.u32 %v1488, 7
    %v1490 = vsub.s32 %v1487, %v1489
    %v1491 = vrot.slane %v1477, %v1490
    %v1492 = vcombine.low %v1484, %v1491
    %v1494 = vunpack.c.l.s4 1966171168
    %v1495 = vunpack.c.0.s8 %v1494
    %v1496 = vlaneseq
    %v1497 = vshrl.u32 %v1496, 7
    %v1498 = vsub.s32 %v1495, %v1497
    %v1499 = vrot.slane %v1492, %v1498
    %v1501 = vadd.f32 %v1329, %v1499
    %v1502 = vxor.u32 %v1501, 2147483648
    %v1503 = vmul.f32 %v1502, 1.442695
    %v1504 = vpow.pop %v1503
    %v1505 = vadd.f32 %v1504, 1.0
    %v1506 = vrcp.pop %v1505
    %v1507 = vmul.f32 1.0, %v1506
    %v1509 = vrot.slane %v1501, 1
    %v1511 = vxor.u32 %v1509, 2147483648
    %v1512 = vmul.f32 %v1511, 1.442695
    %v1513 = vpow.pop %v1512
    %v1514 = vadd.f32 %v1513, 1.0
    %v1515 = vrcp.pop %v1514
    %v1516 = vmul.f32 1.0, %v1515
    %v1517 = vrot.slane %v1501, 2
    %v1519 = vtanh.pop %v1517
    %v1520 = vrot.slane %v1501, 3
    %v1522 = vxor.u32 %v1520, 2147483648
    %v1523 = vmul.f32 %v1522, 1.442695
    %v1524 = vpow.pop %v1523
    %v1525 = vadd.f32 %v1524, 1.0
    %v1526 = vrcp.pop %v1525
    %v1527 = vmul.f32 1.0, %v1526
    %v1528 = vmul.f32 %v1516, %v1325
    %v1529 = vmul.f32 %v1507, %v1519
    %v1530 = vadd.f32 %v1528, %v1529
    %v1531 = vtanh.pop %v1530
    %v1532 = vmul.f32 %v1527, %v1531
    %s1533 = scalar_lea.vmem [#allocation2], 6
    %v1534 = vld [vmem:[%s1533] ss:$8 sm:$0xf]
    %1535 = vmatprep.subr.mxu0 %v302
    %1536 = vmatpush1.msra.mxu0 %v301
    %1537 = vmatprep.subr.mxu0 %v298
    %1538 = vmatpush1.msra.mxu0 %v297
    %1539 = vmatprep.subr.mxu0 %v294
    %1540 = vmatpush1.msra.mxu0 %v293
    %1541 = vmatprep.subr.mxu0 %v290
    %1542 = vmatpush1.msra.mxu0 %v289
    %1543 = vmatprep.subr.mxu0 %v286
    %1544 = vmatpush1.msra.mxu0 %v285
    %1545 = vmatprep.subr.mxu0 %v282
    %1546 = vmatpush1.msra.mxu0 %v281
    %1547 = vmatprep.subr.mxu0 %v278
    %1548 = vmatpush1.msra.mxu0 %v277
    %1549 = vmatprep.subr.mxu0 %v274
    %1550 = vmatpush1.msra.mxu0 %v273
    %1551 = vmatprep.subr.mxu0 %v270
    %1552 = vmatpush1.msra.mxu0 %v269
    %1553 = vmatprep.subr.mxu0 %v266
    %1554 = vmatpush1.msra.mxu0 %v265
    %1555 = vmatprep.subr.mxu0 %v262
    %1556 = vmatpush1.msra.mxu0 %v261
    %1557 = vmatprep.subr.mxu0 %v258
    %1558 = vmatpush1.msra.mxu0 %v257
    %1559 = vmatprep.subr.mxu0 %v254
    %1560 = vmatpush1.msra.mxu0 %v253
    %1561 = vmatprep.subr.mxu0 %v250
    %1562 = vmatpush1.msra.mxu0 %v249
    %1563 = vmatprep.subr.mxu0 %v246
    %1564 = vmatpush1.msra.mxu0 %v245
    %1565 = vmatprep.subr.mxu0 %v242
    %1566 = vmatpush1.msra.mxu0 %v241
    %1567 = vmatprep.subr.mxu0 0.0
    %1568 = vmatpush2.msra.mxu0 0.0
    %1569 = vmatprep.subr.mxu0 0.0
    %1570 = vmatpush2.msra.mxu0 0.0
    %1571 = vmatprep.subr.mxu0 0.0
    %1572 = vmatpush2.msra.mxu0 0.0
    %1573 = vmatprep.subr.mxu0 0.0
    %1574 = vmatpush2.msra.mxu0 0.0
    %1575 = vmatprep.subr.mxu0 0.0
    %1576 = vmatpush2.msra.mxu0 0.0
    %1577 = vmatprep.subr.mxu0 0.0
    %1578 = vmatpush2.msra.mxu0 0.0
    %1579 = vmatprep.subr.mxu0 0.0
    %1580 = vmatpush2.msra.mxu0 0.0
    %1581 = vmatprep.subr.mxu0 0.0
    %1582 = vmatpush2.msra.mxu0 0.0
    %1583 = vmatprep.subr.mxu0 0.0
    %1584 = vmatpush2.msra.mxu0 0.0
    %1585 = vmatprep.subr.mxu0 0.0
    %1586 = vmatpush2.msra.mxu0 0.0
    %1587 = vmatprep.subr.mxu0 0.0
    %1588 = vmatpush2.msra.mxu0 0.0
    %1589 = vmatprep.subr.mxu0 0.0
    %1590 = vmatpush2.msra.mxu0 0.0
    %1591 = vmatprep.subr.mxu0 0.0
    %1592 = vmatpush2.msra.mxu0 0.0
    %1593 = vmatprep.subr.mxu0 0.0
    %1594 = vmatpush2.msra.mxu0 0.0
    %1595 = vmatprep.subr.mxu0 0.0
    %1596 = vmatpush2.msra.mxu0 0.0
    %1597 = vmatprep.subr.mxu0 0.0
    %1598 = vmatpush2.msra.mxu0 0.0
    %1599 = vmatprep.mubr.f32.mxu0 0.0
    %1600 = vmatmul.mubr.f32.gmra.mxu0 %v1532
    %v1601 = vpop.f32.mrf.mxu0
    %v1602 = vadd.f32 0.0, %v1601
    %v1603 = vpop.f32.mrf.mxu0
    %v1604 = vadd.f32 0.0, %v1603
    %1605 = vdwg.mxu0
    %1606 = vmatprep.subr.mxu0 %v304
    %1607 = vmatpush1.msra.mxu0 %v303
    %1608 = vmatprep.subr.mxu0 %v300
    %1609 = vmatpush1.msra.mxu0 %v299
    %1610 = vmatprep.subr.mxu0 %v296
    %1611 = vmatpush1.msra.mxu0 %v295
    %1612 = vmatprep.subr.mxu0 %v292
    %1613 = vmatpush1.msra.mxu0 %v291
    %1614 = vmatprep.subr.mxu0 %v288
    %1615 = vmatpush1.msra.mxu0 %v287
    %1616 = vmatprep.subr.mxu0 %v284
    %1617 = vmatpush1.msra.mxu0 %v283
    %1618 = vmatprep.subr.mxu0 %v280
    %1619 = vmatpush1.msra.mxu0 %v279
    %1620 = vmatprep.subr.mxu0 %v276
    %1621 = vmatpush1.msra.mxu0 %v275
    %1622 = vmatprep.subr.mxu0 %v272
    %1623 = vmatpush1.msra.mxu0 %v271
    %1624 = vmatprep.subr.mxu0 %v268
    %1625 = vmatpush1.msra.mxu0 %v267
    %1626 = vmatprep.subr.mxu0 %v264
    %1627 = vmatpush1.msra.mxu0 %v263
    %1628 = vmatprep.subr.mxu0 %v260
    %1629 = vmatpush1.msra.mxu0 %v259
    %1630 = vmatprep.subr.mxu0 %v256
    %1631 = vmatpush1.msra.mxu0 %v255
    %1632 = vmatprep.subr.mxu0 %v252
    %1633 = vmatpush1.msra.mxu0 %v251
    %1634 = vmatprep.subr.mxu0 %v248
    %1635 = vmatpush1.msra.mxu0 %v247
    %1636 = vmatprep.subr.mxu0 %v244
    %1637 = vmatpush1.msra.mxu0 %v243
    %1638 = vmatprep.subr.mxu0 0.0
    %1639 = vmatpush2.msra.mxu0 0.0
    %1640 = vmatprep.subr.mxu0 0.0
    %1641 = vmatpush2.msra.mxu0 0.0
    %1642 = vmatprep.subr.mxu0 0.0
    %1643 = vmatpush2.msra.mxu0 0.0
    %1644 = vmatprep.subr.mxu0 0.0
    %1645 = vmatpush2.msra.mxu0 0.0
    %1646 = vmatprep.subr.mxu0 0.0
    %1647 = vmatpush2.msra.mxu0 0.0
    %1648 = vmatprep.subr.mxu0 0.0
    %1649 = vmatpush2.msra.mxu0 0.0
    %1650 = vmatprep.subr.mxu0 0.0
    %1651 = vmatpush2.msra.mxu0 0.0
    %1652 = vmatprep.subr.mxu0 0.0
    %1653 = vmatpush2.msra.mxu0 0.0
    %1654 = vmatprep.subr.mxu0 0.0
    %1655 = vmatpush2.msra.mxu0 0.0
    %1656 = vmatprep.subr.mxu0 0.0
    %1657 = vmatpush2.msra.mxu0 0.0
    %1658 = vmatprep.subr.mxu0 0.0
    %1659 = vmatpush2.msra.mxu0 0.0
    %1660 = vmatprep.subr.mxu0 0.0
    %1661 = vmatpush2.msra.mxu0 0.0
    %1662 = vmatprep.subr.mxu0 0.0
    %1663 = vmatpush2.msra.mxu0 0.0
    %1664 = vmatprep.subr.mxu0 0.0
    %1665 = vmatpush2.msra.mxu0 0.0
    %1666 = vmatprep.subr.mxu0 0.0
    %1667 = vmatpush2.msra.mxu0 0.0
    %1668 = vmatprep.subr.mxu0 0.0
    %1669 = vmatpush2.msra.mxu0 0.0
    %1670 = vmatprep.mubr.f32.mxu0 0.0
    %1671 = vmatmul.mubr.f32.gmra.mxu0 %v1532
    %v1672 = vpop.f32.mrf.mxu0
    %v1673 = vadd.f32 0.0, %v1672
    %v1674 = vpop.f32.mrf.mxu0
    %v1675 = vadd.f32 0.0, %v1674
    %1676 = vdwg.mxu0
    %v1681 = vcombine.low %v1602, %v1604
    %v1682 = vcombine.low %v1673, %v1675
    %v1684 = vunpack.c.l.s4 1966171168
    %v1685 = vunpack.c.0.s8 %v1684
    %v1686 = vlaneseq
    %v1687 = vshrl.u32 %v1686, 7
    %v1688 = vsub.s32 %v1685, %v1687
    %v1689 = vrot.slane %v1681, %v1688
    %v1691 = vunpack.c.l.s4 1966171168
    %v1692 = vunpack.c.0.s8 %v1691
    %v1693 = vlaneseq
    %v1694 = vshrl.u32 %v1693, 7
    %v1695 = vsub.s32 %v1692, %v1694
    %v1696 = vrot.slane %v1682, %v1695
    %v1697 = vcombine.low %v1689, %v1696
    %v1699 = vunpack.c.l.s4 1966171168
    %v1700 = vunpack.c.0.s8 %v1699
    %v1701 = vlaneseq
    %v1702 = vshrl.u32 %v1701, 7
    %v1703 = vsub.s32 %v1700, %v1702
    %v1704 = vrot.slane %v1697, %v1703
    %v1706 = vadd.f32 %v1534, %v1704
    %v1707 = vxor.u32 %v1706, 2147483648
    %v1708 = vmul.f32 %v1707, 1.442695
    %v1709 = vpow.pop %v1708
    %v1710 = vadd.f32 %v1709, 1.0
    %v1711 = vrcp.pop %v1710
    %v1712 = vmul.f32 1.0, %v1711
    %v1714 = vrot.slane %v1706, 1
    %v1716 = vxor.u32 %v1714, 2147483648
    %v1717 = vmul.f32 %v1716, 1.442695
    %v1718 = vpow.pop %v1717
    %v1719 = vadd.f32 %v1718, 1.0
    %v1720 = vrcp.pop %v1719
    %v1721 = vmul.f32 1.0, %v1720
    %v1722 = vrot.slane %v1706, 2
    %v1724 = vtanh.pop %v1722
    %v1725 = vrot.slane %v1706, 3
    %v1727 = vxor.u32 %v1725, 2147483648
    %v1728 = vmul.f32 %v1727, 1.442695
    %v1729 = vpow.pop %v1728
    %v1730 = vadd.f32 %v1729, 1.0
    %v1731 = vrcp.pop %v1730
    %v1732 = vmul.f32 1.0, %v1731
    %v1733 = vmul.f32 %v1721, %v1530
    %v1734 = vmul.f32 %v1712, %v1724
    %v1735 = vadd.f32 %v1733, %v1734
    %v1736 = vtanh.pop %v1735
    %v1737 = vmul.f32 %v1732, %v1736
    %s1738 = scalar_lea.vmem [#allocation2], 7
    %v1739 = vld [vmem:[%s1738] ss:$8 sm:$0xf]
    %1740 = vmatprep.subr.mxu0 %v302
    %1741 = vmatpush1.msra.mxu0 %v301
    %1742 = vmatprep.subr.mxu0 %v298
    %1743 = vmatpush1.msra.mxu0 %v297
    %1744 = vmatprep.subr.mxu0 %v294
    %1745 = vmatpush1.msra.mxu0 %v293
    %1746 = vmatprep.subr.mxu0 %v290
    %1747 = vmatpush1.msra.mxu0 %v289
    %1748 = vmatprep.subr.mxu0 %v286
    %1749 = vmatpush1.msra.mxu0 %v285
    %1750 = vmatprep.subr.mxu0 %v282
    %1751 = vmatpush1.msra.mxu0 %v281
    %1752 = vmatprep.subr.mxu0 %v278
    %1753 = vmatpush1.msra.mxu0 %v277
    %1754 = vmatprep.subr.mxu0 %v274
    %1755 = vmatpush1.msra.mxu0 %v273
    %1756 = vmatprep.subr.mxu0 %v270
    %1757 = vmatpush1.msra.mxu0 %v269
    %1758 = vmatprep.subr.mxu0 %v266
    %1759 = vmatpush1.msra.mxu0 %v265
    %1760 = vmatprep.subr.mxu0 %v262
    %1761 = vmatpush1.msra.mxu0 %v261
    %1762 = vmatprep.subr.mxu0 %v258
    %1763 = vmatpush1.msra.mxu0 %v257
    %1764 = vmatprep.subr.mxu0 %v254
    %1765 = vmatpush1.msra.mxu0 %v253
    %1766 = vmatprep.subr.mxu0 %v250
    %1767 = vmatpush1.msra.mxu0 %v249
    %1768 = vmatprep.subr.mxu0 %v246
    %1769 = vmatpush1.msra.mxu0 %v245
    %1770 = vmatprep.subr.mxu0 %v242
    %1771 = vmatpush1.msra.mxu0 %v241
    %1772 = vmatprep.subr.mxu0 0.0
    %1773 = vmatpush2.msra.mxu0 0.0
    %1774 = vmatprep.subr.mxu0 0.0
    %1775 = vmatpush2.msra.mxu0 0.0
    %1776 = vmatprep.subr.mxu0 0.0
    %1777 = vmatpush2.msra.mxu0 0.0
    %1778 = vmatprep.subr.mxu0 0.0
    %1779 = vmatpush2.msra.mxu0 0.0
    %1780 = vmatprep.subr.mxu0 0.0
    %1781 = vmatpush2.msra.mxu0 0.0
    %1782 = vmatprep.subr.mxu0 0.0
    %1783 = vmatpush2.msra.mxu0 0.0
    %1784 = vmatprep.subr.mxu0 0.0
    %1785 = vmatpush2.msra.mxu0 0.0
    %1786 = vmatprep.subr.mxu0 0.0
    %1787 = vmatpush2.msra.mxu0 0.0
    %1788 = vmatprep.subr.mxu0 0.0
    %1789 = vmatpush2.msra.mxu0 0.0
    %1790 = vmatprep.subr.mxu0 0.0
    %1791 = vmatpush2.msra.mxu0 0.0
    %1792 = vmatprep.subr.mxu0 0.0
    %1793 = vmatpush2.msra.mxu0 0.0
    %1794 = vmatprep.subr.mxu0 0.0
    %1795 = vmatpush2.msra.mxu0 0.0
    %1796 = vmatprep.subr.mxu0 0.0
    %1797 = vmatpush2.msra.mxu0 0.0
    %1798 = vmatprep.subr.mxu0 0.0
    %1799 = vmatpush2.msra.mxu0 0.0
    %1800 = vmatprep.subr.mxu0 0.0
    %1801 = vmatpush2.msra.mxu0 0.0
    %1802 = vmatprep.subr.mxu0 0.0
    %1803 = vmatpush2.msra.mxu0 0.0
    %1804 = vmatprep.mubr.f32.mxu0 0.0
    %1805 = vmatmul.mubr.f32.gmra.mxu0 %v1737
    %v1806 = vpop.f32.mrf.mxu0
    %v1807 = vadd.f32 0.0, %v1806
    %v1808 = vpop.f32.mrf.mxu0
    %v1809 = vadd.f32 0.0, %v1808
    %1810 = vdwg.mxu0
    %1811 = vmatprep.subr.mxu0 %v304
    %1812 = vmatpush1.msra.mxu0 %v303
    %1813 = vmatprep.subr.mxu0 %v300
    %1814 = vmatpush1.msra.mxu0 %v299
    %1815 = vmatprep.subr.mxu0 %v296
    %1816 = vmatpush1.msra.mxu0 %v295
    %1817 = vmatprep.subr.mxu0 %v292
    %1818 = vmatpush1.msra.mxu0 %v291
    %1819 = vmatprep.subr.mxu0 %v288
    %1820 = vmatpush1.msra.mxu0 %v287
    %1821 = vmatprep.subr.mxu0 %v284
    %1822 = vmatpush1.msra.mxu0 %v283
    %1823 = vmatprep.subr.mxu0 %v280
    %1824 = vmatpush1.msra.mxu0 %v279
    %1825 = vmatprep.subr.mxu0 %v276
    %1826 = vmatpush1.msra.mxu0 %v275
    %1827 = vmatprep.subr.mxu0 %v272
    %1828 = vmatpush1.msra.mxu0 %v271
    %1829 = vmatprep.subr.mxu0 %v268
    %1830 = vmatpush1.msra.mxu0 %v267
    %1831 = vmatprep.subr.mxu0 %v264
    %1832 = vmatpush1.msra.mxu0 %v263
    %1833 = vmatprep.subr.mxu0 %v260
    %1834 = vmatpush1.msra.mxu0 %v259
    %1835 = vmatprep.subr.mxu0 %v256
    %1836 = vmatpush1.msra.mxu0 %v255
    %1837 = vmatprep.subr.mxu0 %v252
    %1838 = vmatpush1.msra.mxu0 %v251
    %1839 = vmatprep.subr.mxu0 %v248
    %1840 = vmatpush1.msra.mxu0 %v247
    %1841 = vmatprep.subr.mxu0 %v244
    %1842 = vmatpush1.msra.mxu0 %v243
    %1843 = vmatprep.subr.mxu0 0.0
    %1844 = vmatpush2.msra.mxu0 0.0
    %1845 = vmatprep.subr.mxu0 0.0
    %1846 = vmatpush2.msra.mxu0 0.0
    %1847 = vmatprep.subr.mxu0 0.0
    %1848 = vmatpush2.msra.mxu0 0.0
    %1849 = vmatprep.subr.mxu0 0.0
    %1850 = vmatpush2.msra.mxu0 0.0
    %1851 = vmatprep.subr.mxu0 0.0
    %1852 = vmatpush2.msra.mxu0 0.0
    %1853 = vmatprep.subr.mxu0 0.0
    %1854 = vmatpush2.msra.mxu0 0.0
    %1855 = vmatprep.subr.mxu0 0.0
    %1856 = vmatpush2.msra.mxu0 0.0
    %1857 = vmatprep.subr.mxu0 0.0
    %1858 = vmatpush2.msra.mxu0 0.0
    %1859 = vmatprep.subr.mxu0 0.0
    %1860 = vmatpush2.msra.mxu0 0.0
    %1861 = vmatprep.subr.mxu0 0.0
    %1862 = vmatpush2.msra.mxu0 0.0
    %1863 = vmatprep.subr.mxu0 0.0
    %1864 = vmatpush2.msra.mxu0 0.0
    %1865 = vmatprep.subr.mxu0 0.0
    %1866 = vmatpush2.msra.mxu0 0.0
    %1867 = vmatprep.subr.mxu0 0.0
    %1868 = vmatpush2.msra.mxu0 0.0
    %1869 = vmatprep.subr.mxu0 0.0
    %1870 = vmatpush2.msra.mxu0 0.0
    %1871 = vmatprep.subr.mxu0 0.0
    %1872 = vmatpush2.msra.mxu0 0.0
    %1873 = vmatprep.subr.mxu0 0.0
    %1874 = vmatpush2.msra.mxu0 0.0
    %1875 = vmatprep.mubr.f32.mxu0 0.0
    %1876 = vmatmul.mubr.f32.gmra.mxu0 %v1737
    %v1877 = vpop.f32.mrf.mxu0
    %v1878 = vadd.f32 0.0, %v1877
    %v1879 = vpop.f32.mrf.mxu0
    %v1880 = vadd.f32 0.0, %v1879
    %1881 = vdwg.mxu0
    %v1886 = vcombine.low %v1807, %v1809
    %v1887 = vcombine.low %v1878, %v1880
    %v1889 = vunpack.c.l.s4 1966171168
    %v1890 = vunpack.c.0.s8 %v1889
    %v1891 = vlaneseq
    %v1892 = vshrl.u32 %v1891, 7
    %v1893 = vsub.s32 %v1890, %v1892
    %v1894 = vrot.slane %v1886, %v1893
    %v1896 = vunpack.c.l.s4 1966171168
    %v1897 = vunpack.c.0.s8 %v1896
    %v1898 = vlaneseq
    %v1899 = vshrl.u32 %v1898, 7
    %v1900 = vsub.s32 %v1897, %v1899
    %v1901 = vrot.slane %v1887, %v1900
    %v1902 = vcombine.low %v1894, %v1901
    %v1904 = vunpack.c.l.s4 1966171168
    %v1905 = vunpack.c.0.s8 %v1904
    %v1906 = vlaneseq
    %v1907 = vshrl.u32 %v1906, 7
    %v1908 = vsub.s32 %v1905, %v1907
    %v1909 = vrot.slane %v1902, %v1908
    %v1911 = vadd.f32 %v1739, %v1909
    %v1912 = vxor.u32 %v1911, 2147483648
    %v1913 = vmul.f32 %v1912, 1.442695
    %v1914 = vpow.pop %v1913
    %v1915 = vadd.f32 %v1914, 1.0
    %v1916 = vrcp.pop %v1915
    %v1917 = vmul.f32 1.0, %v1916
    %v1919 = vrot.slane %v1911, 1
    %v1921 = vxor.u32 %v1919, 2147483648
    %v1922 = vmul.f32 %v1921, 1.442695
    %v1923 = vpow.pop %v1922
    %v1924 = vadd.f32 %v1923, 1.0
    %v1925 = vrcp.pop %v1924
    %v1926 = vmul.f32 1.0, %v1925
    %v1927 = vrot.slane %v1911, 2
    %v1929 = vtanh.pop %v1927
    %v1930 = vrot.slane %v1911, 3
    %v1932 = vxor.u32 %v1930, 2147483648
    %v1933 = vmul.f32 %v1932, 1.442695
    %v1934 = vpow.pop %v1933
    %v1935 = vadd.f32 %v1934, 1.0
    %v1936 = vrcp.pop %v1935
    %v1937 = vmul.f32 1.0, %v1936
    %v1938 = vmul.f32 %v1926, %v1735
    %v1939 = vmul.f32 %v1917, %v1929
    %v1940 = vadd.f32 %v1938, %v1939
    %v1941 = vtanh.pop %v1940
    %v1942 = vmul.f32 %v1937, %v1941
    %v1943 = vld [vmem:[%s4] sm:$0x1]
    %v1944 = vmul.f32 %v1942, %v1943
    %vm1945 = vcmask 1040384
    %v1946 = vsel %vm1945, %v1944, 0.0
    %1947 = vadd.xlane.f32.xlu0 %v1946
    %v1948 = vpop.xlane.xlu0 %1947
    %v1949 = vld [vmem:[#allocation3] sm:$0x1]
    %v1950 = vadd.f32 %v1948, %v1949
    %vm1951 = vcmask 0
    %1952 = vst.msk [vmem:[#allocation9] sm:$0x1] %vm1951, %v1950
    // Predicated region
    $region34: #{tpu_custom_call.1} parent=1 // pred_check
      _
    $region35: #{tpu_custom_call.1} parent=1 // pred_check_branch
      %1954 = sbr.rel (0) target = $region37
    $region36: #{tpu_custom_call.1} parent=1 // pred_region
      %s1956 = ssub.s32 16, 16
      %1957 = vsyncadd [#allocation6], %s1956
      %s1959 = sshll.u32 [#allocation9], 4
      %s1960 = int_to_ptr.vmem [resolvable:$true] %s1959
      %1962 = dma.vmem_to_hbm [thread:$0]  %s1960, 16, %s6, [#allocation6]
    $region37: #{tpu_custom_call.1} parent=1 // pred_fallthru
      _
    // Predicated region
    $region38: #{tpu_custom_call.1} parent=1 // pred_check
      _
    $region39: #{tpu_custom_call.1} parent=1 // pred_check_branch
      %1964 = sbr.rel (0) target = $region41
    $region40: #{tpu_custom_call.1} parent=1 // pred_region
      %1965 = dma.done [#allocation6], 16
    $region41: #{tpu_custom_call.1} parent=1 // pred_fallthru
      _
    %1966 = vsyncpa [#allocation5], 1
    %1967 = vsyncpa [#allocation8], 1
    %1968 = vsyncpa [#allocation6], 1

</llo_original>
